<compile_context>
chip_gen: v5e
topology: v5e:2x2
jax: 0.10.0
libtpu: 0.0.40
codegen_flags: <defaults>
</compile_context>

<pallas_src>
import jax
import jax.numpy as jnp
from jax.experimental import pallas as pl
from jax.experimental.pallas import tpu as pltpu

IMG_SIZE = 16
# NOTE: the original module only type-checks when num_class == embedding dim (10),
# since Linear expects img_size**2 + num_class inputs but cat supplies img_size**2 + 10.
NUM_CLASS = 10
EMB_DIM = 10
FEAT = IMG_SIZE * IMG_SIZE           # 256
HIDDEN = 512
OH = 128                             # one-hot label width, lane-padded from 10
OUT_ROWS = 8                         # sublane-padded M for the final layer


def _round_up(n, m):
    return (n + m - 1) // m * m


def _tpu_generation():
    try:
        kind = jax.devices()[0].device_kind.lower()
    except Exception:
        return 0
    for g in (7, 6, 5, 4, 3, 2):
        if ("v%d" % g) in kind or ("tpu%d" % g) in kind:
            return g
    return 0


def _pick_tile(batch, gen):
    """Batch-tile rows: 256 on 256-wide-MXU chips when it pays, else 128."""
    bp8 = _round_up(batch, 8)
    if gen >= 7:
        # v7x: 256-wide MXU, but 2 TensorCores/chip -> keep >= 2 grid steps.
        tm_max = 256 if bp8 >= 512 else 128
    elif gen == 6:
        # v6e: 2x256x256 MXU, single TC -> 256 as soon as the batch fills it.
        tm_max = 256 if bp8 >= 256 else 128
    else:
        # v5e and older: 4x128x128 MXU; M=128 already saturates it.
        tm_max = 128
    return min(tm_max, bp8)


def _disc_kernel(x_ref, oh_ref,
                 w1d_ref, w1l_ref, b1_ref,
                 w2_ref, b2_ref,
                 w3_ref, b3_ref,
                 w4_ref, b4_ref,
                 o_ref):
    """One (tm, *) batch tile of the 4-layer MLP. bf16 MXU inputs, f32 accum."""
    f32 = jnp.float32
    bf = jnp.bfloat16

    # Layer 1: image part + one-hot label part (two MXU dots) + resident f32 b1.
    h = jnp.dot(x_ref[...], w1d_ref[...], preferred_element_type=f32)
    h = h + jnp.dot(oh_ref[...], w1l_ref[...], preferred_element_type=f32)
    h = h + b1_ref[...]
    h = jnp.maximum(h, 0.2 * h)                      # LeakyReLU(0.2)

    # Layer 2 (+ eval-mode Dropout = identity) + LeakyReLU.
    # TODO(synk): training-mode Dropout(0.4) not implemented (eval only).
    h = jnp.dot(h.astype(bf), w2_ref[...], preferred_element_type=f32) + b2_ref[...]
    h = jnp.maximum(h, 0.2 * h)

    # Layer 3 (+ eval-mode Dropout = identity) + LeakyReLU.
    h = jnp.dot(h.astype(bf), w3_ref[...], preferred_element_type=f32) + b3_ref[...]
    h = jnp.maximum(h, 0.2 * h)

    # Layer 4 (out_features = 1): computed as W4pad @ h^T so the result tile is
    # (OUT_ROWS, tm) -> lane-dense, unmasked stores, contiguous writeback.
    # Row 0 carries the real output; rows 1..7 are zero-weight padding.
    out = jax.lax.dot_general(
        w4_ref[...], h.astype(bf),
        dimension_numbers=(((1,), (1,)), ((), ())),
        preferred_element_type=f32)
    o_ref[...] = out + b4_ref[0]                     # b4 from SMEM scalar


def init_params(key):
    ks = jax.random.split(key, 9)

    def linear(kw, kb, fan_in, fan_out):
        bound = 1.0 / jnp.sqrt(fan_in)
        w = jax.random.uniform(kw, (fan_in, fan_out), jnp.float32, -bound, bound)
        b = jax.random.uniform(kb, (fan_out,), jnp.float32, -bound, bound)
        return w, b

    emb = jax.random.normal(ks[0], (NUM_CLASS, EMB_DIM), jnp.float32)
    w1, b1 = linear(ks[1], ks[2], FEAT + NUM_CLASS, HIDDEN)
    w2, b2 = linear(ks[3], ks[4], HIDDEN, HIDDEN)
    w3, b3 = linear(ks[5], ks[6], HIDDEN, HIDDEN)
    w4, b4 = linear(ks[7], ks[8], HIDDEN, 1)
    return dict(emb=emb, w1=w1, b1=b1, w2=w2, b2=b2, w3=w3, b3=b3, w4=w4, b4=b4)


def discriminator_forward(data, label, params):
    """Eval-mode forward of the cGAN Discriminator. Returns (B, 1) float32."""
    B = data.shape[0]
    gen = _tpu_generation()
    tm = _pick_tile(B, gen)
    Bp = _round_up(B, tm)

    bf = jnp.bfloat16
    x = data.reshape(B, FEAT).astype(bf)                     # (B, 256) bf16
    oh = jax.nn.one_hot(label, OH, dtype=bf)                 # (B, 128) bf16 one-hot
    pad = Bp - B
    if pad:
        x = jnp.pad(x, ((0, pad), (0, 0)))
        oh = jnp.pad(oh, ((0, pad), (0, 0)))

    # Kernel-ready weights (label/data-independent; in a real loop these would
    # be prepared once outside the per-batch call).
    w1d = params["w1"][:FEAT].astype(bf)                               # (256, 512)
    w1l = jnp.zeros((OH, HIDDEN), jnp.float32).at[:NUM_CLASS].set(
        params["emb"] @ params["w1"][FEAT:]).astype(bf)                # (128, 512)
    w2 = params["w2"].astype(bf)
    w3 = params["w3"].astype(bf)
    w4p = jnp.zeros((OUT_ROWS, HIDDEN), jnp.float32).at[0].set(
        params["w4"][:, 0]).astype(bf)                                 # (8, 512)

    def row_spec(cols):
        return pl.BlockSpec((tm, cols), lambda i: (i, 0))

    def res_spec(r, c):
        return pl.BlockSpec((r, c), lambda i: (0, 0))

    out = pl.pallas_call(
        _disc_kernel,
        out_shape=jax.ShapeDtypeStruct((OUT_ROWS, Bp), jnp.float32),
        grid_spec=pltpu.PrefetchScalarGridSpec(
            num_scalar_prefetch=0,
            grid=(Bp // tm,),
            in_specs=[
                row_spec(FEAT),                    # x tile (bf16)
                row_spec(OH),                      # one-hot label tile (bf16)
                res_spec(FEAT, HIDDEN),            # W1 image part (bf16)
                res_spec(OH, HIDDEN),              # W1 label part, emb-folded (bf16)
                res_spec(1, HIDDEN),               # b1 (f32)
                res_spec(HIDDEN, HIDDEN),          # W2 (bf16)
                res_spec(1, HIDDEN),               # b2 (f32)
                res_spec(HIDDEN, HIDDEN),          # W3 (bf16)
                res_spec(1, HIDDEN),               # b3 (f32)
                res_spec(OUT_ROWS, HIDDEN),        # W4 padded to 8 rows (bf16)
                pl.BlockSpec(memory_space=pltpu.MemorySpace.SMEM),  # b4 scalar
            ],
            out_specs=pl.BlockSpec((OUT_ROWS, tm), lambda i: (0, i)),
        ),
        compiler_params=pltpu.CompilerParams(
            dimension_semantics=("parallel",),
            vmem_limit_bytes=32 * 1024 * 1024),
    )(x, oh,
      w1d, w1l, params["b1"].reshape(1, HIDDEN),
      w2, params["b2"].reshape(1, HIDDEN),
      w3, params["b3"].reshape(1, HIDDEN),
      w4p, params["b4"].reshape(1))

    # Row 0 of the lane-dense (8, Bp) result holds the logits; pad cols sliced off.
    return out[0, :B].reshape(B, 1)


def ref_forward(data, label, params):
    """Pure-JAX f32 reference mirroring the PyTorch forward (eval mode)."""
    x = data.reshape(data.shape[0], -1).astype(jnp.float32)
    lv = params["emb"][label]
    h = jnp.concatenate([x, lv], axis=1)
    h = h @ params["w1"] + params["b1"]
    h = jnp.where(h > 0, h, 0.2 * h)
    h = h @ params["w2"] + params["b2"]
    h = jnp.where(h > 0, h, 0.2 * h)
    h = h @ params["w3"] + params["b3"]
    h = jnp.where(h > 0, h, 0.2 * h)
    return h @ params["w4"] + params["b4"]


def ref_forward_matched(data, label, params):
    """Reference replicating the kernel's bf16-input / f32-accumulation scheme."""
    bf = jnp.bfloat16
    f32 = jnp.float32
    x = data.reshape(data.shape[0], -1).astype(f32)
    # One-hot selection of a bf16-cast (emb @ W1_label) row is exact.
    w1l = (params["emb"] @ params["w1"][FEAT:]).astype(bf).astype(f32)
    h = jnp.dot(x.astype(bf), params["w1"][:FEAT].astype(bf),
                preferred_element_type=f32)
    h = h + w1l[label] + params["b1"]
    h = jnp.maximum(h, 0.2 * h)
    h = jnp.dot(h.astype(bf), params["w2"].astype(bf),
                preferred_element_type=f32) + params["b2"]
    h = jnp.maximum(h, 0.2 * h)
    h = jnp.dot(h.astype(bf), params["w3"].astype(bf),
                preferred_element_type=f32) + params["b3"]
    h = jnp.maximum(h, 0.2 * h)
    return jnp.dot(h.astype(bf), params["w4"].astype(bf),
                   preferred_element_type=f32) + params["b4"]


if __name__ == "__main__":
    key = jax.random.PRNGKey(0)
    k_param, _ = jax.random.split(key)
    params = init_params(k_param)

    fwd = jax.jit(discriminator_forward)

    # B=2: single tiny tile.  B=200: multi-step grid + batch padding.
    # B=640: exercises the 256-row tile path on v6e/v7x (128 on v5e).
    for B in (2, 200, 640):
        kd, kl = jax.random.split(jax.random.fold_in(key, B))
        data = jax.random.normal(kd, (B, 1, IMG_SIZE, IMG_SIZE), jnp.float32)  # NCHW
        label = jax.random.randint(kl, (B,), 0, NUM_CLASS, jnp.int32)

        out = jax.block_until_ready(fwd(data, label, params))
        ref_m = jax.block_until_ready(ref_forward_matched(data, label, params))
        ref_f = jax.block_until_ready(ref_forward(data, label, params))

        assert out.shape == (B, 1), out.shape
        # Tight check vs. the precision-matched reference.
        assert jnp.allclose(out, ref_m, atol=2e-2, rtol=2e-2), (
            B, float(jnp.max(jnp.abs(out - ref_m))))
        # Loose check vs. the pure-f32 PyTorch-equivalent reference (bf16 weights).
        assert jnp.allclose(out, ref_f, atol=1.5e-1, rtol=1.5e-1), (
            B, float(jnp.max(jnp.abs(out - ref_f))))

    print("KERNEL_OK")
</pallas_src>

<mosaic_0001>
module attributes {stable_mosaic.version = 11 : i64} {
  func.func @_disc_kernel(%arg0: i32, %arg1: memref<8x256xbf16, #tpu.memory_space<vmem>>, %arg2: memref<8x128xbf16, #tpu.memory_space<vmem>>, %arg3: memref<256x512xbf16, #tpu.memory_space<vmem>>, %arg4: memref<128x512xbf16, #tpu.memory_space<vmem>>, %arg5: memref<1x512xf32, #tpu.memory_space<vmem>>, %arg6: memref<512x512xbf16, #tpu.memory_space<vmem>>, %arg7: memref<1x512xf32, #tpu.memory_space<vmem>>, %arg8: memref<512x512xbf16, #tpu.memory_space<vmem>>, %arg9: memref<1x512xf32, #tpu.memory_space<vmem>>, %arg10: memref<8x512xbf16, #tpu.memory_space<vmem>>, %arg11: memref<1xf32, #tpu.memory_space<smem>>, %arg12: memref<8x8xf32, #tpu.memory_space<vmem>>) attributes {dimension_semantics = [#tpu.dimension_semantics<parallel>], iteration_bounds = array<i64: 1>, scalar_prefetch = 0 : i64, scratch_operands = 0 : i64, tpu.core_type = #tpu.core_type<tc>, window_params = [{transform_indices = @transform_0, window_bounds = array<i64: 8, 256>}, {transform_indices = @transform_1, window_bounds = array<i64: 8, 128>}, {pipeline_mode = #tpu.pipeline_mode<synchronous>, transform_indices = @transform_2, window_bounds = array<i64: 256, 512>}, {pipeline_mode = #tpu.pipeline_mode<synchronous>, transform_indices = @transform_3, window_bounds = array<i64: 128, 512>}, {pipeline_mode = #tpu.pipeline_mode<synchronous>, transform_indices = @transform_4, window_bounds = array<i64: 1, 512>}, {pipeline_mode = #tpu.pipeline_mode<synchronous>, transform_indices = @transform_5, window_bounds = array<i64: 512, 512>}, {pipeline_mode = #tpu.pipeline_mode<synchronous>, transform_indices = @transform_6, window_bounds = array<i64: 1, 512>}, {pipeline_mode = #tpu.pipeline_mode<synchronous>, transform_indices = @transform_7, window_bounds = array<i64: 512, 512>}, {pipeline_mode = #tpu.pipeline_mode<synchronous>, transform_indices = @transform_8, window_bounds = array<i64: 1, 512>}, {pipeline_mode = #tpu.pipeline_mode<synchronous>, transform_indices = @transform_9, window_bounds = array<i64: 8, 512>}, {transform_indices = @transform_10, window_bounds = array<i64: 1>}, {transform_indices = @transform_11, window_bounds = array<i64: 8, 8>}]} {
    %c0 = arith.constant 0 : index
    %c0_0 = arith.constant 0 : index
    %0 = vector.load %arg1[%c0, %c0_0] : memref<8x256xbf16, #tpu.memory_space<vmem>>, vector<8x256xbf16>
    %c0_1 = arith.constant 0 : index
    %c0_2 = arith.constant 0 : index
    %1 = vector.load %arg3[%c0_1, %c0_2] : memref<256x512xbf16, #tpu.memory_space<vmem>>, vector<256x512xbf16>
    %cst = arith.constant dense<0.000000e+00> : vector<8x512xf32>
    %2 = tpu.matmul %0, %1, %cst {dimension_numbers = #tpu.dot_dimension_numbers<[1], [0], [0], [1], [0, 0, 1, 1], [], []>} : vector<8x256xbf16>, vector<256x512xbf16>, vector<8x512xf32> -> vector<8x512xf32>
    %c0_3 = arith.constant 0 : index
    %c0_4 = arith.constant 0 : index
    %3 = vector.load %arg2[%c0_3, %c0_4] : memref<8x128xbf16, #tpu.memory_space<vmem>>, vector<8x128xbf16>
    %c0_5 = arith.constant 0 : index
    %c0_6 = arith.constant 0 : index
    %4 = vector.load %arg4[%c0_5, %c0_6] : memref<128x512xbf16, #tpu.memory_space<vmem>>, vector<128x512xbf16>
    %cst_7 = arith.constant dense<0.000000e+00> : vector<8x512xf32>
    %5 = tpu.matmul %3, %4, %cst_7 {dimension_numbers = #tpu.dot_dimension_numbers<[1], [0], [0], [1], [0, 0, 1, 1], [], []>} : vector<8x128xbf16>, vector<128x512xbf16>, vector<8x512xf32> -> vector<8x512xf32>
    %6 = arith.addf %2, %5 : vector<8x512xf32>
    %c0_8 = arith.constant 0 : index
    %c0_9 = arith.constant 0 : index
    %7 = vector.load %arg5[%c0_8, %c0_9] : memref<1x512xf32, #tpu.memory_space<vmem>>, vector<1x512xf32>
    %8 = vector.broadcast %7 : vector<1x512xf32> to vector<8x512xf32>
    %9 = arith.addf %6, %8 : vector<8x512xf32>
    %cst_10 = arith.constant 2.000000e-01 : f32
    %10 = vector.broadcast %cst_10 : f32 to vector<8x512xf32>
    %11 = arith.mulf %10, %9 : vector<8x512xf32>
    %12 = arith.maximumf %9, %11 : vector<8x512xf32>
    %13 = arith.truncf %12 : vector<8x512xf32> to vector<8x512xbf16>
    %c0_11 = arith.constant 0 : index
    %c0_12 = arith.constant 0 : index
    %14 = vector.load %arg6[%c0_11, %c0_12] : memref<512x512xbf16, #tpu.memory_space<vmem>>, vector<512x512xbf16>
    %cst_13 = arith.constant dense<0.000000e+00> : vector<8x512xf32>
    %15 = tpu.matmul %13, %14, %cst_13 {dimension_numbers = #tpu.dot_dimension_numbers<[1], [0], [0], [1], [0, 0, 1, 1], [], []>} : vector<8x512xbf16>, vector<512x512xbf16>, vector<8x512xf32> -> vector<8x512xf32>
    %c0_14 = arith.constant 0 : index
    %c0_15 = arith.constant 0 : index
    %16 = vector.load %arg7[%c0_14, %c0_15] : memref<1x512xf32, #tpu.memory_space<vmem>>, vector<1x512xf32>
    %17 = vector.broadcast %16 : vector<1x512xf32> to vector<8x512xf32>
    %18 = arith.addf %15, %17 : vector<8x512xf32>
    %cst_16 = arith.constant 2.000000e-01 : f32
    %19 = vector.broadcast %cst_16 : f32 to vector<8x512xf32>
    %20 = arith.mulf %19, %18 : vector<8x512xf32>
    %21 = arith.maximumf %18, %20 : vector<8x512xf32>
    %22 = arith.truncf %21 : vector<8x512xf32> to vector<8x512xbf16>
    %c0_17 = arith.constant 0 : index
    %c0_18 = arith.constant 0 : index
    %23 = vector.load %arg8[%c0_17, %c0_18] : memref<512x512xbf16, #tpu.memory_space<vmem>>, vector<512x512xbf16>
    %cst_19 = arith.constant dense<0.000000e+00> : vector<8x512xf32>
    %24 = tpu.matmul %22, %23, %cst_19 {dimension_numbers = #tpu.dot_dimension_numbers<[1], [0], [0], [1], [0, 0, 1, 1], [], []>} : vector<8x512xbf16>, vector<512x512xbf16>, vector<8x512xf32> -> vector<8x512xf32>
    %c0_20 = arith.constant 0 : index
    %c0_21 = arith.constant 0 : index
    %25 = vector.load %arg9[%c0_20, %c0_21] : memref<1x512xf32, #tpu.memory_space<vmem>>, vector<1x512xf32>
    %26 = vector.broadcast %25 : vector<1x512xf32> to vector<8x512xf32>
    %27 = arith.addf %24, %26 : vector<8x512xf32>
    %cst_22 = arith.constant 2.000000e-01 : f32
    %28 = vector.broadcast %cst_22 : f32 to vector<8x512xf32>
    %29 = arith.mulf %28, %27 : vector<8x512xf32>
    %30 = arith.maximumf %27, %29 : vector<8x512xf32>
    %c0_23 = arith.constant 0 : index
    %c0_24 = arith.constant 0 : index
    %31 = vector.load %arg10[%c0_23, %c0_24] : memref<8x512xbf16, #tpu.memory_space<vmem>>, vector<8x512xbf16>
    %32 = arith.truncf %30 : vector<8x512xf32> to vector<8x512xbf16>
    %cst_25 = arith.constant dense<0.000000e+00> : vector<8x8xf32>
    %33 = tpu.matmul %31, %32, %cst_25 {dimension_numbers = #tpu.dot_dimension_numbers<[1], [1], [0], [0], [0, 0, 1, 0], [], []>} : vector<8x512xbf16>, vector<8x512xbf16>, vector<8x8xf32> -> vector<8x8xf32>
    %c0_26 = arith.constant 0 : index
    %34 = memref.load %arg11[%c0_26] : memref<1xf32, #tpu.memory_space<smem>>
    %35 = vector.broadcast %34 : f32 to vector<8x8xf32>
    %36 = arith.addf %33, %35 : vector<8x8xf32>
    %c0_27 = arith.constant 0 : index
    %c0_28 = arith.constant 0 : index
    %37 = vector.load %arg12[%c0_27, %c0_28] : memref<8x8xf32, #tpu.memory_space<vmem>>, vector<8x8xf32>
    tpu.vector_store %arg12[%c0_27, %c0_28], %36 {strides = array<i32>} : memref<8x8xf32, #tpu.memory_space<vmem>>, vector<8x8xf32>,
    return
  }
  func.func @transform_0(%arg0: i32) -> (i32, i32) {
    %c0_i32 = arith.constant 0 : i32
    %c0_i32_0 = arith.constant 0 : i32
    return %arg0, %c0_i32 : i32, i32
  }
  func.func @transform_1(%arg0: i32) -> (i32, i32) {
    %c0_i32 = arith.constant 0 : i32
    %c0_i32_0 = arith.constant 0 : i32
    return %arg0, %c0_i32 : i32, i32
  }
  func.func @transform_2(%arg0: i32) -> (i32, i32) {
    %c0_i32 = arith.constant 0 : i32
    %c0_i32_0 = arith.constant 0 : i32
    %c0_i32_1 = arith.constant 0 : i32
    return %c0_i32, %c0_i32_0 : i32, i32
  }
  func.func @transform_3(%arg0: i32) -> (i32, i32) {
    %c0_i32 = arith.constant 0 : i32
    %c0_i32_0 = arith.constant 0 : i32
    %c0_i32_1 = arith.constant 0 : i32
    return %c0_i32, %c0_i32_0 : i32, i32
  }
  func.func @transform_4(%arg0: i32) -> (i32, i32) {
    %c0_i32 = arith.constant 0 : i32
    %c0_i32_0 = arith.constant 0 : i32
    %c0_i32_1 = arith.constant 0 : i32
    return %c0_i32, %c0_i32_0 : i32, i32
  }
  func.func @transform_5(%arg0: i32) -> (i32, i32) {
    %c0_i32 = arith.constant 0 : i32
    %c0_i32_0 = arith.constant 0 : i32
    %c0_i32_1 = arith.constant 0 : i32
    return %c0_i32, %c0_i32_0 : i32, i32
  }
  func.func @transform_6(%arg0: i32) -> (i32, i32) {
    %c0_i32 = arith.constant 0 : i32
    %c0_i32_0 = arith.constant 0 : i32
    %c0_i32_1 = arith.constant 0 : i32
    return %c0_i32, %c0_i32_0 : i32, i32
  }
  func.func @transform_7(%arg0: i32) -> (i32, i32) {
    %c0_i32 = arith.constant 0 : i32
    %c0_i32_0 = arith.constant 0 : i32
    %c0_i32_1 = arith.constant 0 : i32
    return %c0_i32, %c0_i32_0 : i32, i32
  }
  func.func @transform_8(%arg0: i32) -> (i32, i32) {
    %c0_i32 = arith.constant 0 : i32
    %c0_i32_0 = arith.constant 0 : i32
    %c0_i32_1 = arith.constant 0 : i32
    return %c0_i32, %c0_i32_0 : i32, i32
  }
  func.func @transform_9(%arg0: i32) -> (i32, i32) {
    %c0_i32 = arith.constant 0 : i32
    %c0_i32_0 = arith.constant 0 : i32
    %c0_i32_1 = arith.constant 0 : i32
    return %c0_i32, %c0_i32_0 : i32, i32
  }
  func.func @transform_10(%arg0: i32) -> i32 {
    %c0_i32 = arith.constant 0 : i32
    %c0_i32_0 = arith.constant 0 : i32
    return %c0_i32 : i32
  }
  func.func @transform_11(%arg0: i32) -> (i32, i32) {
    %c0_i32 = arith.constant 0 : i32
    %c0_i32_0 = arith.constant 0 : i32
    return %c0_i32, %arg0 : i32, i32
  }
}

</mosaic_0001>

<llo_original>
// kernel: discriminator_forward.1
$region0: #{discriminator_forward.1}
  #allocation0 [shape = 'u32[]', space=smem, size = 0x4, offset = 0x4, fixed_abs, tag = 'smem constant byte address 0x4 - core index']
  #allocation1 [shape = 'u32[72,128]{1,0:T(1,128)}', space=vmem, size = 0x9000, scoped, tag = 'internal scratch']
  #allocation2 [shape = 'f32[1]{0:T(128)S(6)}', space=smem, size = 0x200, scoped, tag = 'scoped memory for discriminator_forward.1']
  %s0 = inlined_call_operand.vmem [shape: bf16[8,256], index: 0, kind: input, shape index: {}]
  %s1 = inlined_call_operand.vmem [shape: bf16[8,128], index: 1, kind: input, shape index: {}]
  %s2 = inlined_call_operand.vmem [shape: bf16[256,512], index: 2, kind: input, shape index: {}]
  %s3 = inlined_call_operand.vmem [shape: bf16[128,512], index: 3, kind: input, shape index: {}]
  %s4 = inlined_call_operand.vmem [shape: f32[1,512], index: 4, kind: input, shape index: {}]
  %s5 = inlined_call_operand.vmem [shape: bf16[512,512], index: 5, kind: input, shape index: {}]
  %s6 = inlined_call_operand.vmem [shape: f32[1,512], index: 6, kind: input, shape index: {}]
  %s7 = inlined_call_operand.vmem [shape: bf16[512,512], index: 7, kind: input, shape index: {}]
  %s8 = inlined_call_operand.vmem [shape: f32[1,512], index: 8, kind: input, shape index: {}]
  %s9 = inlined_call_operand.vmem [shape: bf16[8,512], index: 9, kind: input, shape index: {}]
  %s10 = inlined_call_operand.<no memory space> [shape: f32[1], index: 10, kind: input, shape index: {}]
  %s11 = inlined_call_operand.vmem [shape: f32[8,8], index: 11, kind: output, shape index: {}]
  %s12 = sld [smem:[#allocation0]]
  $region54: #{discriminator_forward.1} parent=0
    _
  %s14 = ssub.s32 1, %s12
  %s15 = scalar_select 0, %s14, %s12
  %16 = sst [smem:[#allocation2]] %s10
  // Predicated region
  $region2: #{discriminator_forward.1} parent=0 // pred_check
    _
  $region3: #{discriminator_forward.1} parent=0 // pred_check_branch
    %18 = sbr.rel (0) target = $region5
  $region4: #{discriminator_forward.1} parent=0 // pred_region
    _
  $region5: #{discriminator_forward.1} parent=0 // pred_fallthru
    _
  // Predicated region
  $region6: #{discriminator_forward.1} parent=0 // pred_check
    _
  $region7: #{discriminator_forward.1} parent=0 // pred_check_branch
    %20 = sbr.rel (0) target = $region9
  $region8: #{discriminator_forward.1} parent=0 // pred_region
    _
  $region9: #{discriminator_forward.1} parent=0 // pred_fallthru
    _
  // Predicated region
  $region10: #{discriminator_forward.1} parent=0 // pred_check
    _
  $region11: #{discriminator_forward.1} parent=0 // pred_check_branch
    %22 = sbr.rel (0) target = $region13
  $region12: #{discriminator_forward.1} parent=0 // pred_region
    _
  $region13: #{discriminator_forward.1} parent=0 // pred_fallthru
    _
  // Predicated region
  $region14: #{discriminator_forward.1} parent=0 // pred_check
    _
  $region15: #{discriminator_forward.1} parent=0 // pred_check_branch
    %24 = sbr.rel (0) target = $region17
  $region16: #{discriminator_forward.1} parent=0 // pred_region
    _
  $region17: #{discriminator_forward.1} parent=0 // pred_fallthru
    _
  // Predicated region
  $region18: #{discriminator_forward.1} parent=0 // pred_check
    _
  $region19: #{discriminator_forward.1} parent=0 // pred_check_branch
    %26 = sbr.rel (0) target = $region21
  $region20: #{discriminator_forward.1} parent=0 // pred_region
    _
  $region21: #{discriminator_forward.1} parent=0 // pred_fallthru
    _
  // Predicated region
  $region22: #{discriminator_forward.1} parent=0 // pred_check
    _
  $region23: #{discriminator_forward.1} parent=0 // pred_check_branch
    %28 = sbr.rel (0) target = $region25
  $region24: #{discriminator_forward.1} parent=0 // pred_region
    _
  $region25: #{discriminator_forward.1} parent=0 // pred_fallthru
    _
  // Predicated region
  $region26: #{discriminator_forward.1} parent=0 // pred_check
    _
  $region27: #{discriminator_forward.1} parent=0 // pred_check_branch
    %30 = sbr.rel (0) target = $region29
  $region28: #{discriminator_forward.1} parent=0 // pred_region
    _
  $region29: #{discriminator_forward.1} parent=0 // pred_fallthru
    _
  // Predicated region
  $region30: #{discriminator_forward.1} parent=0 // pred_check
    _
  $region31: #{discriminator_forward.1} parent=0 // pred_check_branch
    %32 = sbr.rel (0) target = $region33
  $region32: #{discriminator_forward.1} parent=0 // pred_region
    _
  $region33: #{discriminator_forward.1} parent=0 // pred_fallthru
    _
  // Predicated region
  $region34: #{discriminator_forward.1} parent=0 // pred_check
    _
  $region35: #{discriminator_forward.1} parent=0 // pred_check_branch
    %34 = sbr.rel (0) target = $region37
  $region36: #{discriminator_forward.1} parent=0 // pred_region
    _
  $region37: #{discriminator_forward.1} parent=0 // pred_fallthru
    _
  // Predicated region
  $region38: #{discriminator_forward.1} parent=0 // pred_check
    _
  $region39: #{discriminator_forward.1} parent=0 // pred_check_branch
    %36 = sbr.rel (0) target = $region41
  $region40: #{discriminator_forward.1} parent=0 // pred_region
    _
  $region41: #{discriminator_forward.1} parent=0 // pred_fallthru
    _
  // Predicated region
  $region42: #{discriminator_forward.1} parent=0 // pred_check
    _
  $region43: #{discriminator_forward.1} parent=0 // pred_check_branch
    %38 = sbr.rel (0) target = $region45
  $region44: #{discriminator_forward.1} parent=0 // pred_region
    _
  $region45: #{discriminator_forward.1} parent=0 // pred_fallthru
    _
  %v40 = vld [vmem:[%s0] sm:$0xff]
  %v41 = vld [vmem:[%s2] sm:$0xff]
  %v42 = vld [vmem:[%s2 + $0x8] sm:$0xff]
  %v43 = vld [vmem:[%s2 + $0x10] sm:$0xff]
  %v44 = vld [vmem:[%s2 + $0x18] sm:$0xff]
  %v45 = vld [vmem:[%s2 + $0x20] sm:$0xff]
  %v46 = vld [vmem:[%s2 + $0x28] sm:$0xff]
  %v47 = vld [vmem:[%s2 + $0x30] sm:$0xff]
  %v48 = vld [vmem:[%s2 + $0x38] sm:$0xff]
  %v49 = vld [vmem:[%s2 + $0x40] sm:$0xff]
  %v50 = vld [vmem:[%s2 + $0x48] sm:$0xff]
  %v51 = vld [vmem:[%s2 + $0x50] sm:$0xff]
  %v52 = vld [vmem:[%s2 + $0x58] sm:$0xff]
  %v53 = vld [vmem:[%s2 + $0x60] sm:$0xff]
  %v54 = vld [vmem:[%s2 + $0x68] sm:$0xff]
  %v55 = vld [vmem:[%s2 + $0x70] sm:$0xff]
  %v56 = vld [vmem:[%s2 + $0x78] sm:$0xff]
  %v57 = vld [vmem:[%s2 + $0x80] sm:$0xff]
  %v58 = vld [vmem:[%s2 + $0x88] sm:$0xff]
  %v59 = vld [vmem:[%s2 + $0x90] sm:$0xff]
  %v60 = vld [vmem:[%s2 + $0x98] sm:$0xff]
  %v61 = vld [vmem:[%s2 + $0xa0] sm:$0xff]
  %v62 = vld [vmem:[%s2 + $0xa8] sm:$0xff]
  %v63 = vld [vmem:[%s2 + $0xb0] sm:$0xff]
  %v64 = vld [vmem:[%s2 + $0xb8] sm:$0xff]
  %v65 = vld [vmem:[%s2 + $0xc0] sm:$0xff]
  %v66 = vld [vmem:[%s2 + $0xc8] sm:$0xff]
  %v67 = vld [vmem:[%s2 + $0xd0] sm:$0xff]
  %v68 = vld [vmem:[%s2 + $0xd8] sm:$0xff]
  %v69 = vld [vmem:[%s2 + $0xe0] sm:$0xff]
  %v70 = vld [vmem:[%s2 + $0xe8] sm:$0xff]
  %v71 = vld [vmem:[%s2 + $0xf0] sm:$0xff]
  %v72 = vld [vmem:[%s2 + $0xf8] sm:$0xff]
  %v73 = vld [vmem:[%s2 + $0x100] sm:$0xff]
  %v74 = vld [vmem:[%s2 + $0x108] sm:$0xff]
  %v75 = vld [vmem:[%s2 + $0x110] sm:$0xff]
  %v76 = vld [vmem:[%s2 + $0x118] sm:$0xff]
  %v77 = vld [vmem:[%s2 + $0x120] sm:$0xff]
  %v78 = vld [vmem:[%s2 + $0x128] sm:$0xff]
  %v79 = vld [vmem:[%s2 + $0x130] sm:$0xff]
  %v80 = vld [vmem:[%s2 + $0x138] sm:$0xff]
  %v81 = vld [vmem:[%s2 + $0x140] sm:$0xff]
  %v82 = vld [vmem:[%s2 + $0x148] sm:$0xff]
  %v83 = vld [vmem:[%s2 + $0x150] sm:$0xff]
  %v84 = vld [vmem:[%s2 + $0x158] sm:$0xff]
  %v85 = vld [vmem:[%s2 + $0x160] sm:$0xff]
  %v86 = vld [vmem:[%s2 + $0x168] sm:$0xff]
  %v87 = vld [vmem:[%s2 + $0x170] sm:$0xff]
  %v88 = vld [vmem:[%s2 + $0x178] sm:$0xff]
  %v89 = vld [vmem:[%s2 + $0x180] sm:$0xff]
  %v90 = vld [vmem:[%s2 + $0x188] sm:$0xff]
  %v91 = vld [vmem:[%s2 + $0x190] sm:$0xff]
  %v92 = vld [vmem:[%s2 + $0x198] sm:$0xff]
  %v93 = vld [vmem:[%s2 + $0x1a0] sm:$0xff]
  %v94 = vld [vmem:[%s2 + $0x1a8] sm:$0xff]
  %v95 = vld [vmem:[%s2 + $0x1b0] sm:$0xff]
  %v96 = vld [vmem:[%s2 + $0x1b8] sm:$0xff]
  %v97 = vld [vmem:[%s2 + $0x1c0] sm:$0xff]
  %v98 = vld [vmem:[%s2 + $0x1c8] sm:$0xff]
  %v99 = vld [vmem:[%s2 + $0x1d0] sm:$0xff]
  %v100 = vld [vmem:[%s2 + $0x1d8] sm:$0xff]
  %v101 = vld [vmem:[%s2 + $0x1e0] sm:$0xff]
  %v102 = vld [vmem:[%s2 + $0x1e8] sm:$0xff]
  %v103 = vld [vmem:[%s2 + $0x1f0] sm:$0xff]
  %v104 = vld [vmem:[%s2 + $0x1f8] sm:$0xff]
  %v105 = vld [vmem:[%s1] sm:$0xf]
  %v106 = vld [vmem:[%s3] sm:$0xff]
  %v107 = vld [vmem:[%s3 + $0x8] sm:$0xff]
  %v108 = vld [vmem:[%s3 + $0x10] sm:$0xff]
  %v109 = vld [vmem:[%s3 + $0x18] sm:$0xff]
  %v110 = vld [vmem:[%s3 + $0x20] sm:$0xff]
  %v111 = vld [vmem:[%s3 + $0x28] sm:$0xff]
  %v112 = vld [vmem:[%s3 + $0x30] sm:$0xff]
  %v113 = vld [vmem:[%s3 + $0x38] sm:$0xff]
  %v114 = vld [vmem:[%s3 + $0x40] sm:$0xff]
  %v115 = vld [vmem:[%s3 + $0x48] sm:$0xff]
  %v116 = vld [vmem:[%s3 + $0x50] sm:$0xff]
  %v117 = vld [vmem:[%s3 + $0x58] sm:$0xff]
  %v118 = vld [vmem:[%s3 + $0x60] sm:$0xff]
  %v119 = vld [vmem:[%s3 + $0x68] sm:$0xff]
  %v120 = vld [vmem:[%s3 + $0x70] sm:$0xff]
  %v121 = vld [vmem:[%s3 + $0x78] sm:$0xff]
  %v122 = vld [vmem:[%s3 + $0x80] sm:$0xff]
  %v123 = vld [vmem:[%s3 + $0x88] sm:$0xff]
  %v124 = vld [vmem:[%s3 + $0x90] sm:$0xff]
  %v125 = vld [vmem:[%s3 + $0x98] sm:$0xff]
  %v126 = vld [vmem:[%s3 + $0xa0] sm:$0xff]
  %v127 = vld [vmem:[%s3 + $0xa8] sm:$0xff]
  %v128 = vld [vmem:[%s3 + $0xb0] sm:$0xff]
  %v129 = vld [vmem:[%s3 + $0xb8] sm:$0xff]
  %v130 = vld [vmem:[%s3 + $0xc0] sm:$0xff]
  %v131 = vld [vmem:[%s3 + $0xc8] sm:$0xff]
  %v132 = vld [vmem:[%s3 + $0xd0] sm:$0xff]
  %v133 = vld [vmem:[%s3 + $0xd8] sm:$0xff]
  %v134 = vld [vmem:[%s3 + $0xe0] sm:$0xff]
  %v135 = vld [vmem:[%s3 + $0xe8] sm:$0xff]
  %v136 = vld [vmem:[%s3 + $0xf0] sm:$0xff]
  %v137 = vld [vmem:[%s3 + $0xf8] sm:$0xff]
  %v170 = vunpack.c.l.b16 %v106
  %v171 = vunpack.c.h.b16 %v106
  %v172 = vunpack.c.l.b16 %v107
  %v173 = vunpack.c.h.b16 %v107
  %v174 = vunpack.c.l.b16 %v108
  %v175 = vunpack.c.h.b16 %v108
  %v176 = vunpack.c.l.b16 %v109
  %v177 = vunpack.c.h.b16 %v109
  %v178 = vunpack.c.l.b16 %v110
  %v179 = vunpack.c.h.b16 %v110
  %v180 = vunpack.c.l.b16 %v111
  %v181 = vunpack.c.h.b16 %v111
  %v182 = vunpack.c.l.b16 %v112
  %v183 = vunpack.c.h.b16 %v112
  %v184 = vunpack.c.l.b16 %v113
  %v185 = vunpack.c.h.b16 %v113
  %v186 = vunpack.c.l.b16 %v114
  %v187 = vunpack.c.h.b16 %v114
  %v188 = vunpack.c.l.b16 %v115
  %v189 = vunpack.c.h.b16 %v115
  %v190 = vunpack.c.l.b16 %v116
  %v191 = vunpack.c.h.b16 %v116
  %v192 = vunpack.c.l.b16 %v117
  %v193 = vunpack.c.h.b16 %v117
  %v194 = vunpack.c.l.b16 %v118
  %v195 = vunpack.c.h.b16 %v118
  %v196 = vunpack.c.l.b16 %v119
  %v197 = vunpack.c.h.b16 %v119
  %v198 = vunpack.c.l.b16 %v120
  %v199 = vunpack.c.h.b16 %v120
  %v200 = vunpack.c.l.b16 %v121
  %v201 = vunpack.c.h.b16 %v121
  %v202 = vunpack.c.l.b16 %v122
  %v203 = vunpack.c.h.b16 %v122
  %v204 = vunpack.c.l.b16 %v123
  %v205 = vunpack.c.h.b16 %v123
  %v206 = vunpack.c.l.b16 %v124
  %v207 = vunpack.c.h.b16 %v124
  %v208 = vunpack.c.l.b16 %v125
  %v209 = vunpack.c.h.b16 %v125
  %v210 = vunpack.c.l.b16 %v126
  %v211 = vunpack.c.h.b16 %v126
  %v212 = vunpack.c.l.b16 %v127
  %v213 = vunpack.c.h.b16 %v127
  %v214 = vunpack.c.l.b16 %v128
  %v215 = vunpack.c.h.b16 %v128
  %v216 = vunpack.c.l.b16 %v129
  %v217 = vunpack.c.h.b16 %v129
  %v218 = vunpack.c.l.b16 %v130
  %v219 = vunpack.c.h.b16 %v130
  %v220 = vunpack.c.l.b16 %v131
  %v221 = vunpack.c.h.b16 %v131
  %v222 = vunpack.c.l.b16 %v132
  %v223 = vunpack.c.h.b16 %v132
  %v224 = vunpack.c.l.b16 %v133
  %v225 = vunpack.c.h.b16 %v133
  %v226 = vunpack.c.l.b16 %v134
  %v227 = vunpack.c.h.b16 %v134
  %v228 = vunpack.c.l.b16 %v135
  %v229 = vunpack.c.h.b16 %v135
  %v230 = vunpack.c.l.b16 %v136
  %v231 = vunpack.c.h.b16 %v136
  %v232 = vunpack.c.l.b16 %v137
  %v233 = vunpack.c.h.b16 %v137
  %v234 = vpack.c.b16 %v174, %v170
  %v235 = vpack.c.b16 %v175, %v171
  %v236 = vpack.c.b16 %v176, %v172
  %v237 = vpack.c.b16 %v177, %v173
  %v238 = vpack.c.b16 %v182, %v178
  %v239 = vpack.c.b16 %v183, %v179
  %v240 = vpack.c.b16 %v184, %v180
  %v241 = vpack.c.b16 %v185, %v181
  %v242 = vpack.c.b16 %v190, %v186
  %v243 = vpack.c.b16 %v191, %v187
  %v244 = vpack.c.b16 %v192, %v188
  %v245 = vpack.c.b16 %v193, %v189
  %v246 = vpack.c.b16 %v198, %v194
  %v247 = vpack.c.b16 %v199, %v195
  %v248 = vpack.c.b16 %v200, %v196
  %v249 = vpack.c.b16 %v201, %v197
  %v250 = vpack.c.b16 %v206, %v202
  %v251 = vpack.c.b16 %v207, %v203
  %v252 = vpack.c.b16 %v208, %v204
  %v253 = vpack.c.b16 %v209, %v205
  %v254 = vpack.c.b16 %v214, %v210
  %v255 = vpack.c.b16 %v215, %v211
  %v256 = vpack.c.b16 %v216, %v212
  %v257 = vpack.c.b16 %v217, %v213
  %v258 = vpack.c.b16 %v222, %v218
  %v259 = vpack.c.b16 %v223, %v219
  %v260 = vpack.c.b16 %v224, %v220
  %v261 = vpack.c.b16 %v225, %v221
  %v262 = vpack.c.b16 %v230, %v226
  %v263 = vpack.c.b16 %v231, %v227
  %v264 = vpack.c.b16 %v232, %v228
  %v265 = vpack.c.b16 %v233, %v229
  %298 = vmatpush.bf16.msra.mxu0 %v262
  %299 = vmatpush.bf16.msra.mxu0 %v258
  %300 = vmatpush.bf16.msra.mxu0 %v254
  %301 = vmatpush.bf16.msra.mxu0 %v250
  %302 = vmatpush.bf16.msra.mxu0 %v246
  %303 = vmatpush.bf16.msra.mxu0 %v242
  %304 = vmatpush.bf16.msra.mxu0 %v238
  %305 = vmatpush.bf16.msra.mxu0 %v234
  %306 = vmatmul.bf16.gmra.mxu0 %v105
  %v307 = vpop.f32.mrf.mxu0
  %v308 = vadd.f32 0.0, %v307
  %v309 = vpop.f32.mrf.mxu0
  %310 = vdwg.mxu0
  %311 = vmatpush.bf16.msra.mxu0 %v263
  %312 = vmatpush.bf16.msra.mxu0 %v259
  %313 = vmatpush.bf16.msra.mxu0 %v255
  %314 = vmatpush.bf16.msra.mxu0 %v251
  %315 = vmatpush.bf16.msra.mxu0 %v247
  %316 = vmatpush.bf16.msra.mxu0 %v243
  %317 = vmatpush.bf16.msra.mxu0 %v239
  %318 = vmatpush.bf16.msra.mxu0 %v235
  %319 = vmatmul.bf16.gmra.mxu0 %v105
  %v320 = vpop.f32.mrf.mxu0
  %v321 = vadd.f32 0.0, %v320
  %v322 = vpop.f32.mrf.mxu0
  %323 = vdwg.mxu0
  %324 = vmatpush.bf16.msra.mxu0 %v264
  %325 = vmatpush.bf16.msra.mxu0 %v260
  %326 = vmatpush.bf16.msra.mxu0 %v256
  %327 = vmatpush.bf16.msra.mxu0 %v252
  %328 = vmatpush.bf16.msra.mxu0 %v248
  %329 = vmatpush.bf16.msra.mxu0 %v244
  %330 = vmatpush.bf16.msra.mxu0 %v240
  %331 = vmatpush.bf16.msra.mxu0 %v236
  %332 = vmatmul.bf16.gmra.mxu0 %v105
  %v333 = vpop.f32.mrf.mxu0
  %v334 = vadd.f32 0.0, %v333
  %v335 = vpop.f32.mrf.mxu0
  %336 = vdwg.mxu0
  %337 = vmatpush.bf16.msra.mxu0 %v265
  %338 = vmatpush.bf16.msra.mxu0 %v261
  %339 = vmatpush.bf16.msra.mxu0 %v257
  %340 = vmatpush.bf16.msra.mxu0 %v253
  %341 = vmatpush.bf16.msra.mxu0 %v249
  %342 = vmatpush.bf16.msra.mxu0 %v245
  %343 = vmatpush.bf16.msra.mxu0 %v241
  %344 = vmatpush.bf16.msra.mxu0 %v237
  %345 = vmatmul.bf16.gmra.mxu0 %v105
  %v346 = vpop.f32.mrf.mxu0
  %v347 = vadd.f32 0.0, %v346
  %v348 = vpop.f32.mrf.mxu0
  %349 = vdwg.mxu0
  %v351 = vunpack.c.l.b16 %v40
  %v352 = vunpack.c.h.b16 %v40
  %v353 = vpack.c.b16 %v351, %v351
  %v354 = vpack.c.b16 %v352, %v352
  %v421 = vunpack.c.l.b16 %v41
  %v422 = vunpack.c.h.b16 %v41
  %v423 = vunpack.c.l.b16 %v42
  %v424 = vunpack.c.h.b16 %v42
  %v425 = vunpack.c.l.b16 %v43
  %v426 = vunpack.c.h.b16 %v43
  %v427 = vunpack.c.l.b16 %v44
  %v428 = vunpack.c.h.b16 %v44
  %v429 = vunpack.c.l.b16 %v45
  %v430 = vunpack.c.h.b16 %v45
  %v431 = vunpack.c.l.b16 %v46
  %v432 = vunpack.c.h.b16 %v46
  %v433 = vunpack.c.l.b16 %v47
  %v434 = vunpack.c.h.b16 %v47
  %v435 = vunpack.c.l.b16 %v48
  %v436 = vunpack.c.h.b16 %v48
  %v437 = vunpack.c.l.b16 %v49
  %v438 = vunpack.c.h.b16 %v49
  %v439 = vunpack.c.l.b16 %v50
  %v440 = vunpack.c.h.b16 %v50
  %v441 = vunpack.c.l.b16 %v51
  %v442 = vunpack.c.h.b16 %v51
  %v443 = vunpack.c.l.b16 %v52
  %v444 = vunpack.c.h.b16 %v52
  %v445 = vunpack.c.l.b16 %v53
  %v446 = vunpack.c.h.b16 %v53
  %v447 = vunpack.c.l.b16 %v54
  %v448 = vunpack.c.h.b16 %v54
  %v449 = vunpack.c.l.b16 %v55
  %v450 = vunpack.c.h.b16 %v55
  %v451 = vunpack.c.l.b16 %v56
  %v452 = vunpack.c.h.b16 %v56
  %v453 = vunpack.c.l.b16 %v57
  %v454 = vunpack.c.h.b16 %v57
  %v455 = vunpack.c.l.b16 %v58
  %v456 = vunpack.c.h.b16 %v58
  %v457 = vunpack.c.l.b16 %v59
  %v458 = vunpack.c.h.b16 %v59
  %v459 = vunpack.c.l.b16 %v60
  %v460 = vunpack.c.h.b16 %v60
  %v461 = vunpack.c.l.b16 %v61
  %v462 = vunpack.c.h.b16 %v61
  %v463 = vunpack.c.l.b16 %v62
  %v464 = vunpack.c.h.b16 %v62
  %v465 = vunpack.c.l.b16 %v63
  %v466 = vunpack.c.h.b16 %v63
  %v467 = vunpack.c.l.b16 %v64
  %v468 = vunpack.c.h.b16 %v64
  %v469 = vunpack.c.l.b16 %v65
  %v470 = vunpack.c.h.b16 %v65
  %v471 = vunpack.c.l.b16 %v66
  %v472 = vunpack.c.h.b16 %v66
  %v473 = vunpack.c.l.b16 %v67
  %v474 = vunpack.c.h.b16 %v67
  %v475 = vunpack.c.l.b16 %v68
  %v476 = vunpack.c.h.b16 %v68
  %v477 = vunpack.c.l.b16 %v69
  %v478 = vunpack.c.h.b16 %v69
  %v479 = vunpack.c.l.b16 %v70
  %v480 = vunpack.c.h.b16 %v70
  %v481 = vunpack.c.l.b16 %v71
  %v482 = vunpack.c.h.b16 %v71
  %v483 = vunpack.c.l.b16 %v72
  %v484 = vunpack.c.h.b16 %v72
  %v485 = vunpack.c.l.b16 %v73
  %v486 = vunpack.c.h.b16 %v73
  %v487 = vunpack.c.l.b16 %v74
  %v488 = vunpack.c.h.b16 %v74
  %v489 = vunpack.c.l.b16 %v75
  %v490 = vunpack.c.h.b16 %v75
  %v491 = vunpack.c.l.b16 %v76
  %v492 = vunpack.c.h.b16 %v76
  %v493 = vunpack.c.l.b16 %v77
  %v494 = vunpack.c.h.b16 %v77
  %v495 = vunpack.c.l.b16 %v78
  %v496 = vunpack.c.h.b16 %v78
  %v497 = vunpack.c.l.b16 %v79
  %v498 = vunpack.c.h.b16 %v79
  %v499 = vunpack.c.l.b16 %v80
  %v500 = vunpack.c.h.b16 %v80
  %v501 = vunpack.c.l.b16 %v81
  %v502 = vunpack.c.h.b16 %v81
  %v503 = vunpack.c.l.b16 %v82
  %v504 = vunpack.c.h.b16 %v82
  %v505 = vunpack.c.l.b16 %v83
  %v506 = vunpack.c.h.b16 %v83
  %v507 = vunpack.c.l.b16 %v84
  %v508 = vunpack.c.h.b16 %v84
  %v509 = vunpack.c.l.b16 %v85
  %v510 = vunpack.c.h.b16 %v85
  %v511 = vunpack.c.l.b16 %v86
  %v512 = vunpack.c.h.b16 %v86
  %v513 = vunpack.c.l.b16 %v87
  %v514 = vunpack.c.h.b16 %v87
  %v515 = vunpack.c.l.b16 %v88
  %v516 = vunpack.c.h.b16 %v88
  %v517 = vunpack.c.l.b16 %v89
  %v518 = vunpack.c.h.b16 %v89
  %v519 = vunpack.c.l.b16 %v90
  %v520 = vunpack.c.h.b16 %v90
  %v521 = vunpack.c.l.b16 %v91
  %v522 = vunpack.c.h.b16 %v91
  %v523 = vunpack.c.l.b16 %v92
  %v524 = vunpack.c.h.b16 %v92
  %v525 = vunpack.c.l.b16 %v93
  %v526 = vunpack.c.h.b16 %v93
  %v527 = vunpack.c.l.b16 %v94
  %v528 = vunpack.c.h.b16 %v94
  %v529 = vunpack.c.l.b16 %v95
  %v530 = vunpack.c.h.b16 %v95
  %v531 = vunpack.c.l.b16 %v96
  %v532 = vunpack.c.h.b16 %v96
  %v533 = vunpack.c.l.b16 %v97
  %v534 = vunpack.c.h.b16 %v97
  %v535 = vunpack.c.l.b16 %v98
  %v536 = vunpack.c.h.b16 %v98
  %v537 = vunpack.c.l.b16 %v99
  %v538 = vunpack.c.h.b16 %v99
  %v539 = vunpack.c.l.b16 %v100
  %v540 = vunpack.c.h.b16 %v100
  %v541 = vunpack.c.l.b16 %v101
  %v542 = vunpack.c.h.b16 %v101
  %v543 = vunpack.c.l.b16 %v102
  %v544 = vunpack.c.h.b16 %v102
  %v545 = vunpack.c.l.b16 %v103
  %v546 = vunpack.c.h.b16 %v103
  %v547 = vunpack.c.l.b16 %v104
  %v548 = vunpack.c.h.b16 %v104
  %v549 = vpack.c.b16 %v425, %v421
  %v550 = vpack.c.b16 %v426, %v422
  %v551 = vpack.c.b16 %v427, %v423
  %v552 = vpack.c.b16 %v428, %v424
  %v553 = vpack.c.b16 %v433, %v429
  %v554 = vpack.c.b16 %v434, %v430
  %v555 = vpack.c.b16 %v435, %v431
  %v556 = vpack.c.b16 %v436, %v432
  %v557 = vpack.c.b16 %v441, %v437
  %v558 = vpack.c.b16 %v442, %v438
  %v559 = vpack.c.b16 %v443, %v439
  %v560 = vpack.c.b16 %v444, %v440
  %v561 = vpack.c.b16 %v449, %v445
  %v562 = vpack.c.b16 %v450, %v446
  %v563 = vpack.c.b16 %v451, %v447
  %v564 = vpack.c.b16 %v452, %v448
  %v565 = vpack.c.b16 %v457, %v453
  %v566 = vpack.c.b16 %v458, %v454
  %v567 = vpack.c.b16 %v459, %v455
  %v568 = vpack.c.b16 %v460, %v456
  %v569 = vpack.c.b16 %v465, %v461
  %v570 = vpack.c.b16 %v466, %v462
  %v571 = vpack.c.b16 %v467, %v463
  %v572 = vpack.c.b16 %v468, %v464
  %v573 = vpack.c.b16 %v473, %v469
  %v574 = vpack.c.b16 %v474, %v470
  %v575 = vpack.c.b16 %v475, %v471
  %v576 = vpack.c.b16 %v476, %v472
  %v577 = vpack.c.b16 %v481, %v477
  %v578 = vpack.c.b16 %v482, %v478
  %v579 = vpack.c.b16 %v483, %v479
  %v580 = vpack.c.b16 %v484, %v480
  %v581 = vpack.c.b16 %v489, %v485
  %v582 = vpack.c.b16 %v490, %v486
  %v583 = vpack.c.b16 %v491, %v487
  %v584 = vpack.c.b16 %v492, %v488
  %v585 = vpack.c.b16 %v497, %v493
  %v586 = vpack.c.b16 %v498, %v494
  %v587 = vpack.c.b16 %v499, %v495
  %v588 = vpack.c.b16 %v500, %v496
  %v589 = vpack.c.b16 %v505, %v501
  %v590 = vpack.c.b16 %v506, %v502
  %v591 = vpack.c.b16 %v507, %v503
  %v592 = vpack.c.b16 %v508, %v504
  %v593 = vpack.c.b16 %v513, %v509
  %v594 = vpack.c.b16 %v514, %v510
  %v595 = vpack.c.b16 %v515, %v511
  %v596 = vpack.c.b16 %v516, %v512
  %v597 = vpack.c.b16 %v521, %v517
  %v598 = vpack.c.b16 %v522, %v518
  %v599 = vpack.c.b16 %v523, %v519
  %v600 = vpack.c.b16 %v524, %v520
  %v601 = vpack.c.b16 %v529, %v525
  %v602 = vpack.c.b16 %v530, %v526
  %v603 = vpack.c.b16 %v531, %v527
  %v604 = vpack.c.b16 %v532, %v528
  %v605 = vpack.c.b16 %v537, %v533
  %v606 = vpack.c.b16 %v538, %v534
  %v607 = vpack.c.b16 %v539, %v535
  %v608 = vpack.c.b16 %v540, %v536
  %v609 = vpack.c.b16 %v545, %v541
  %v610 = vpack.c.b16 %v546, %v542
  %v611 = vpack.c.b16 %v547, %v543
  %v612 = vpack.c.b16 %v548, %v544
  %677 = vmatpush.bf16.msra.mxu0 %v577
  %678 = vmatpush.bf16.msra.mxu0 %v573
  %679 = vmatpush.bf16.msra.mxu0 %v569
  %680 = vmatpush.bf16.msra.mxu0 %v565
  %681 = vmatpush.bf16.msra.mxu0 %v561
  %682 = vmatpush.bf16.msra.mxu0 %v557
  %683 = vmatpush.bf16.msra.mxu0 %v553
  %684 = vmatpush.bf16.msra.mxu0 %v549
  %685 = vmatmul.bf16.gmra.mxu0 %v353
  %v686 = vpop.f32.mrf.mxu0
  %v687 = vadd.f32 %v308, %v686
  %v688 = vpop.f32.mrf.mxu0
  %689 = vdwg.mxu0
  %690 = vmatpush.bf16.msra.mxu0 %v609
  %691 = vmatpush.bf16.msra.mxu0 %v605
  %692 = vmatpush.bf16.msra.mxu0 %v601
  %693 = vmatpush.bf16.msra.mxu0 %v597
  %694 = vmatpush.bf16.msra.mxu0 %v593
  %695 = vmatpush.bf16.msra.mxu0 %v589
  %696 = vmatpush.bf16.msra.mxu0 %v585
  %697 = vmatpush.bf16.msra.mxu0 %v581
  %698 = vmatmul.bf16.gmra.mxu0 %v354
  %v699 = vpop.f32.mrf.mxu0
  %v700 = vadd.f32 %v687, %v699
  %v701 = vpop.f32.mrf.mxu0
  %702 = vdwg.mxu0
  %703 = vmatpush.bf16.msra.mxu0 %v578
  %704 = vmatpush.bf16.msra.mxu0 %v574
  %705 = vmatpush.bf16.msra.mxu0 %v570
  %706 = vmatpush.bf16.msra.mxu0 %v566
  %707 = vmatpush.bf16.msra.mxu0 %v562
  %708 = vmatpush.bf16.msra.mxu0 %v558
  %709 = vmatpush.bf16.msra.mxu0 %v554
  %710 = vmatpush.bf16.msra.mxu0 %v550
  %711 = vmatmul.bf16.gmra.mxu0 %v353
  %v712 = vpop.f32.mrf.mxu0
  %v713 = vadd.f32 %v321, %v712
  %v714 = vpop.f32.mrf.mxu0
  %715 = vdwg.mxu0
  %716 = vmatpush.bf16.msra.mxu0 %v610
  %717 = vmatpush.bf16.msra.mxu0 %v606
  %718 = vmatpush.bf16.msra.mxu0 %v602
  %719 = vmatpush.bf16.msra.mxu0 %v598
  %720 = vmatpush.bf16.msra.mxu0 %v594
  %721 = vmatpush.bf16.msra.mxu0 %v590
  %722 = vmatpush.bf16.msra.mxu0 %v586
  %723 = vmatpush.bf16.msra.mxu0 %v582
  %724 = vmatmul.bf16.gmra.mxu0 %v354
  %v725 = vpop.f32.mrf.mxu0
  %v726 = vadd.f32 %v713, %v725
  %v727 = vpop.f32.mrf.mxu0
  %728 = vdwg.mxu0
  %729 = vmatpush.bf16.msra.mxu0 %v579
  %730 = vmatpush.bf16.msra.mxu0 %v575
  %731 = vmatpush.bf16.msra.mxu0 %v571
  %732 = vmatpush.bf16.msra.mxu0 %v567
  %733 = vmatpush.bf16.msra.mxu0 %v563
  %734 = vmatpush.bf16.msra.mxu0 %v559
  %735 = vmatpush.bf16.msra.mxu0 %v555
  %736 = vmatpush.bf16.msra.mxu0 %v551
  %737 = vmatmul.bf16.gmra.mxu0 %v353
  %v738 = vpop.f32.mrf.mxu0
  %v739 = vadd.f32 %v334, %v738
  %v740 = vpop.f32.mrf.mxu0
  %741 = vdwg.mxu0
  %742 = vmatpush.bf16.msra.mxu0 %v611
  %743 = vmatpush.bf16.msra.mxu0 %v607
  %744 = vmatpush.bf16.msra.mxu0 %v603
  %745 = vmatpush.bf16.msra.mxu0 %v599
  %746 = vmatpush.bf16.msra.mxu0 %v595
  %747 = vmatpush.bf16.msra.mxu0 %v591
  %748 = vmatpush.bf16.msra.mxu0 %v587
  %749 = vmatpush.bf16.msra.mxu0 %v583
  %750 = vmatmul.bf16.gmra.mxu0 %v354
  %v751 = vpop.f32.mrf.mxu0
  %v752 = vadd.f32 %v739, %v751
  %v753 = vpop.f32.mrf.mxu0
  %754 = vdwg.mxu0
  %755 = vmatpush.bf16.msra.mxu0 %v580
  %756 = vmatpush.bf16.msra.mxu0 %v576
  %757 = vmatpush.bf16.msra.mxu0 %v572
  %758 = vmatpush.bf16.msra.mxu0 %v568
  %759 = vmatpush.bf16.msra.mxu0 %v564
  %760 = vmatpush.bf16.msra.mxu0 %v560
  %761 = vmatpush.bf16.msra.mxu0 %v556
  %762 = vmatpush.bf16.msra.mxu0 %v552
  %763 = vmatmul.bf16.gmra.mxu0 %v353
  %v764 = vpop.f32.mrf.mxu0
  %v765 = vadd.f32 %v347, %v764
  %v766 = vpop.f32.mrf.mxu0
  %767 = vdwg.mxu0
  %768 = vmatpush.bf16.msra.mxu0 %v612
  %769 = vmatpush.bf16.msra.mxu0 %v608
  %770 = vmatpush.bf16.msra.mxu0 %v604
  %771 = vmatpush.bf16.msra.mxu0 %v600
  %772 = vmatpush.bf16.msra.mxu0 %v596
  %773 = vmatpush.bf16.msra.mxu0 %v592
  %774 = vmatpush.bf16.msra.mxu0 %v588
  %775 = vmatpush.bf16.msra.mxu0 %v584
  %776 = vmatmul.bf16.gmra.mxu0 %v354
  %v777 = vpop.f32.mrf.mxu0
  %v778 = vadd.f32 %v765, %v777
  %v779 = vpop.f32.mrf.mxu0
  %780 = vdwg.mxu0
  %v781 = vld [vmem:[%s4] sm:$0xf]
  %v783 = vperm.slane %v781, 0
  %v784 = vperm.slane %v781, 1
  %v785 = vperm.slane %v781, 2
  %v786 = vperm.slane %v781, 3
  %v791 = vadd.f32 %v700, %v783
  %v792 = vadd.f32 %v726, %v784
  %v793 = vadd.f32 %v752, %v785
  %v794 = vadd.f32 %v778, %v786
  %v795 = vmul.f32 %v791, 0.2
  %v796 = vmul.f32 %v792, 0.2
  %v797 = vmul.f32 %v793, 0.2
  %v798 = vmul.f32 %v794, 0.2
  %v799 = vmax.f32 %v791, %v795
  %v800 = vmax.f32 %v792, %v796
  %v801 = vmax.f32 %v793, %v797
  %v802 = vmax.f32 %v794, %v798
  %v803 = vpack.c.bf16 %v799, %v799
  %v804 = vpack.c.bf16 %v800, %v800
  %v805 = vpack.c.bf16 %v801, %v801
  %v806 = vpack.c.bf16 %v802, %v802
  %v807 = vld [vmem:[%s5] sm:$0xff]
  %v808 = vld [vmem:[%s5 + $0x8] sm:$0xff]
  %v809 = vld [vmem:[%s5 + $0x10] sm:$0xff]
  %v810 = vld [vmem:[%s5 + $0x18] sm:$0xff]
  %v811 = vld [vmem:[%s5 + $0x20] sm:$0xff]
  %v812 = vld [vmem:[%s5 + $0x28] sm:$0xff]
  %v813 = vld [vmem:[%s5 + $0x30] sm:$0xff]
  %v814 = vld [vmem:[%s5 + $0x38] sm:$0xff]
  %v815 = vld [vmem:[%s5 + $0x40] sm:$0xff]
  %v816 = vld [vmem:[%s5 + $0x48] sm:$0xff]
  %v817 = vld [vmem:[%s5 + $0x50] sm:$0xff]
  %v818 = vld [vmem:[%s5 + $0x58] sm:$0xff]
  %v819 = vld [vmem:[%s5 + $0x60] sm:$0xff]
  %v820 = vld [vmem:[%s5 + $0x68] sm:$0xff]
  %v821 = vld [vmem:[%s5 + $0x70] sm:$0xff]
  %v822 = vld [vmem:[%s5 + $0x78] sm:$0xff]
  %v823 = vld [vmem:[%s5 + $0x80] sm:$0xff]
  %v824 = vld [vmem:[%s5 + $0x88] sm:$0xff]
  %v825 = vld [vmem:[%s5 + $0x90] sm:$0xff]
  %v826 = vld [vmem:[%s5 + $0x98] sm:$0xff]
  %v827 = vld [vmem:[%s5 + $0xa0] sm:$0xff]
  %v828 = vld [vmem:[%s5 + $0xa8] sm:$0xff]
  %v829 = vld [vmem:[%s5 + $0xb0] sm:$0xff]
  %v830 = vld [vmem:[%s5 + $0xb8] sm:$0xff]
  %v831 = vld [vmem:[%s5 + $0xc0] sm:$0xff]
  %v832 = vld [vmem:[%s5 + $0xc8] sm:$0xff]
  %v833 = vld [vmem:[%s5 + $0xd0] sm:$0xff]
  %v834 = vld [vmem:[%s5 + $0xd8] sm:$0xff]
  %v835 = vld [vmem:[%s5 + $0xe0] sm:$0xff]
  %v836 = vld [vmem:[%s5 + $0xe8] sm:$0xff]
  %v837 = vld [vmem:[%s5 + $0xf0] sm:$0xff]
  %v838 = vld [vmem:[%s5 + $0xf8] sm:$0xff]
  %v839 = vld [vmem:[%s5 + $0x100] sm:$0xff]
  %v840 = vld [vmem:[%s5 + $0x108] sm:$0xff]
  %v841 = vld [vmem:[%s5 + $0x110] sm:$0xff]
  %v842 = vld [vmem:[%s5 + $0x118] sm:$0xff]
  %v843 = vld [vmem:[%s5 + $0x120] sm:$0xff]
  %v844 = vld [vmem:[%s5 + $0x128] sm:$0xff]
  %v845 = vld [vmem:[%s5 + $0x130] sm:$0xff]
  %v846 = vld [vmem:[%s5 + $0x138] sm:$0xff]
  %v847 = vld [vmem:[%s5 + $0x140] sm:$0xff]
  %v848 = vld [vmem:[%s5 + $0x148] sm:$0xff]
  %v849 = vld [vmem:[%s5 + $0x150] sm:$0xff]
  %v850 = vld [vmem:[%s5 + $0x158] sm:$0xff]
  %v851 = vld [vmem:[%s5 + $0x160] sm:$0xff]
  %v852 = vld [vmem:[%s5 + $0x168] sm:$0xff]
  %v853 = vld [vmem:[%s5 + $0x170] sm:$0xff]
  %v854 = vld [vmem:[%s5 + $0x178] sm:$0xff]
  %v855 = vld [vmem:[%s5 + $0x180] sm:$0xff]
  %v856 = vld [vmem:[%s5 + $0x188] sm:$0xff]
  %v857 = vld [vmem:[%s5 + $0x190] sm:$0xff]
  %v858 = vld [vmem:[%s5 + $0x198] sm:$0xff]
  %v859 = vld [vmem:[%s5 + $0x1a0] sm:$0xff]
  %v860 = vld [vmem:[%s5 + $0x1a8] sm:$0xff]
  %v861 = vld [vmem:[%s5 + $0x1b0] sm:$0xff]
  %v862 = vld [vmem:[%s5 + $0x1b8] sm:$0xff]
  %v863 = vld [vmem:[%s5 + $0x1c0] sm:$0xff]
  %v864 = vld [vmem:[%s5 + $0x1c8] sm:$0xff]
  %v865 = vld [vmem:[%s5 + $0x1d0] sm:$0xff]
  %v866 = vld [vmem:[%s5 + $0x1d8] sm:$0xff]
  %v867 = vld [vmem:[%s5 + $0x1e0] sm:$0xff]
  %v868 = vld [vmem:[%s5 + $0x1e8] sm:$0xff]
  %v869 = vld [vmem:[%s5 + $0x1f0] sm:$0xff]
  %v870 = vld [vmem:[%s5 + $0x1f8] sm:$0xff]
  %v871 = vld [vmem:[%s5 + $0x200] sm:$0xff]
  %v872 = vld [vmem:[%s5 + $0x208] sm:$0xff]
  %v873 = vld [vmem:[%s5 + $0x210] sm:$0xff]
  %v874 = vld [vmem:[%s5 + $0x218] sm:$0xff]
  %v875 = vld [vmem:[%s5 + $0x220] sm:$0xff]
  %v876 = vld [vmem:[%s5 + $0x228] sm:$0xff]
  %v877 = vld [vmem:[%s5 + $0x230] sm:$0xff]
  %v878 = vld [vmem:[%s5 + $0x238] sm:$0xff]
  %v879 = vld [vmem:[%s5 + $0x240] sm:$0xff]
  %v880 = vld [vmem:[%s5 + $0x248] sm:$0xff]
  %v881 = vld [vmem:[%s5 + $0x250] sm:$0xff]
  %v882 = vld [vmem:[%s5 + $0x258] sm:$0xff]
  %v883 = vld [vmem:[%s5 + $0x260] sm:$0xff]
  %v884 = vld [vmem:[%s5 + $0x268] sm:$0xff]
  %v885 = vld [vmem:[%s5 + $0x270] sm:$0xff]
  %v886 = vld [vmem:[%s5 + $0x278] sm:$0xff]
  %v887 = vld [vmem:[%s5 + $0x280] sm:$0xff]
  %v888 = vld [vmem:[%s5 + $0x288] sm:$0xff]
  %v889 = vld [vmem:[%s5 + $0x290] sm:$0xff]
  %v890 = vld [vmem:[%s5 + $0x298] sm:$0xff]
  %v891 = vld [vmem:[%s5 + $0x2a0] sm:$0xff]
  %v892 = vld [vmem:[%s5 + $0x2a8] sm:$0xff]
  %v893 = vld [vmem:[%s5 + $0x2b0] sm:$0xff]
  %v894 = vld [vmem:[%s5 + $0x2b8] sm:$0xff]
  %v895 = vld [vmem:[%s5 + $0x2c0] sm:$0xff]
  %v896 = vld [vmem:[%s5 + $0x2c8] sm:$0xff]
  %v897 = vld [vmem:[%s5 + $0x2d0] sm:$0xff]
  %v898 = vld [vmem:[%s5 + $0x2d8] sm:$0xff]
  %v899 = vld [vmem:[%s5 + $0x2e0] sm:$0xff]
  %v900 = vld [vmem:[%s5 + $0x2e8] sm:$0xff]
  %v901 = vld [vmem:[%s5 + $0x2f0] sm:$0xff]
  %v902 = vld [vmem:[%s5 + $0x2f8] sm:$0xff]
  %v903 = vld [vmem:[%s5 + $0x300] sm:$0xff]
  %v904 = vld [vmem:[%s5 + $0x308] sm:$0xff]
  %v905 = vld [vmem:[%s5 + $0x310] sm:$0xff]
  %v906 = vld [vmem:[%s5 + $0x318] sm:$0xff]
  %v907 = vld [vmem:[%s5 + $0x320] sm:$0xff]
  %v908 = vld [vmem:[%s5 + $0x328] sm:$0xff]
  %v909 = vld [vmem:[%s5 + $0x330] sm:$0xff]
  %v910 = vld [vmem:[%s5 + $0x338] sm:$0xff]
  %v911 = vld [vmem:[%s5 + $0x340] sm:$0xff]
  %v912 = vld [vmem:[%s5 + $0x348] sm:$0xff]
  %v913 = vld [vmem:[%s5 + $0x350] sm:$0xff]
  %v914 = vld [vmem:[%s5 + $0x358] sm:$0xff]
  %v915 = vld [vmem:[%s5 + $0x360] sm:$0xff]
  %v916 = vld [vmem:[%s5 + $0x368] sm:$0xff]
  %v917 = vld [vmem:[%s5 + $0x370] sm:$0xff]
  %v918 = vld [vmem:[%s5 + $0x378] sm:$0xff]
  %v919 = vld [vmem:[%s5 + $0x380] sm:$0xff]
  %v920 = vld [vmem:[%s5 + $0x388] sm:$0xff]
  %v921 = vld [vmem:[%s5 + $0x390] sm:$0xff]
  %v922 = vld [vmem:[%s5 + $0x398] sm:$0xff]
  %v923 = vld [vmem:[%s5 + $0x3a0] sm:$0xff]
  %v924 = vld [vmem:[%s5 + $0x3a8] sm:$0xff]
  %v925 = vld [vmem:[%s5 + $0x3b0] sm:$0xff]
  %v926 = vld [vmem:[%s5 + $0x3b8] sm:$0xff]
  %v927 = vld [vmem:[%s5 + $0x3c0] sm:$0xff]
  %v928 = vld [vmem:[%s5 + $0x3c8] sm:$0xff]
  %v929 = vld [vmem:[%s5 + $0x3d0] sm:$0xff]
  %v930 = vld [vmem:[%s5 + $0x3d8] sm:$0xff]
  %v931 = vld [vmem:[%s5 + $0x3e0] sm:$0xff]
  %v932 = vld [vmem:[%s5 + $0x3e8] sm:$0xff]
  %v933 = vld [vmem:[%s5 + $0x3f0] sm:$0xff]
  %v934 = vld [vmem:[%s5 + $0x3f8] sm:$0xff]
  %v935 = vld [vmem:[%s6] sm:$0xf]
  %v937 = vperm.slane %v935, 0
  %v938 = vperm.slane %v935, 1
  %v939 = vperm.slane %v935, 2
  %v940 = vperm.slane %v935, 3
  %v1073 = vunpack.c.l.b16 %v807
  %v1074 = vunpack.c.h.b16 %v807
  %v1075 = vunpack.c.l.b16 %v808
  %v1076 = vunpack.c.h.b16 %v808
  %v1077 = vunpack.c.l.b16 %v809
  %v1078 = vunpack.c.h.b16 %v809
  %v1079 = vunpack.c.l.b16 %v810
  %v1080 = vunpack.c.h.b16 %v810
  %v1081 = vunpack.c.l.b16 %v811
  %v1082 = vunpack.c.h.b16 %v811
  %v1083 = vunpack.c.l.b16 %v812
  %v1084 = vunpack.c.h.b16 %v812
  %v1085 = vunpack.c.l.b16 %v813
  %v1086 = vunpack.c.h.b16 %v813
  %v1087 = vunpack.c.l.b16 %v814
  %v1088 = vunpack.c.h.b16 %v814
  %v1089 = vunpack.c.l.b16 %v815
  %v1090 = vunpack.c.h.b16 %v815
  %v1091 = vunpack.c.l.b16 %v816
  %v1092 = vunpack.c.h.b16 %v816
  %v1093 = vunpack.c.l.b16 %v817
  %v1094 = vunpack.c.h.b16 %v817
  %v1095 = vunpack.c.l.b16 %v818
  %v1096 = vunpack.c.h.b16 %v818
  %v1097 = vunpack.c.l.b16 %v819
  %v1098 = vunpack.c.h.b16 %v819
  %v1099 = vunpack.c.l.b16 %v820
  %v1100 = vunpack.c.h.b16 %v820
  %v1101 = vunpack.c.l.b16 %v821
  %v1102 = vunpack.c.h.b16 %v821
  %v1103 = vunpack.c.l.b16 %v822
  %v1104 = vunpack.c.h.b16 %v822
  %v1105 = vunpack.c.l.b16 %v823
  %v1106 = vunpack.c.h.b16 %v823
  %v1107 = vunpack.c.l.b16 %v824
  %v1108 = vunpack.c.h.b16 %v824
  %v1109 = vunpack.c.l.b16 %v825
  %v1110 = vunpack.c.h.b16 %v825
  %v1111 = vunpack.c.l.b16 %v826
  %v1112 = vunpack.c.h.b16 %v826
  %v1113 = vunpack.c.l.b16 %v827
  %v1114 = vunpack.c.h.b16 %v827
  %v1115 = vunpack.c.l.b16 %v828
  %v1116 = vunpack.c.h.b16 %v828
  %v1117 = vunpack.c.l.b16 %v829
  %v1118 = vunpack.c.h.b16 %v829
  %v1119 = vunpack.c.l.b16 %v830
  %v1120 = vunpack.c.h.b16 %v830
  %v1121 = vunpack.c.l.b16 %v831
  %v1122 = vunpack.c.h.b16 %v831
  %v1123 = vunpack.c.l.b16 %v832
  %v1124 = vunpack.c.h.b16 %v832
  %v1125 = vunpack.c.l.b16 %v833
  %v1126 = vunpack.c.h.b16 %v833
  %v1127 = vunpack.c.l.b16 %v834
  %v1128 = vunpack.c.h.b16 %v834
  %v1129 = vunpack.c.l.b16 %v835
  %v1130 = vunpack.c.h.b16 %v835
  %v1131 = vunpack.c.l.b16 %v836
  %v1132 = vunpack.c.h.b16 %v836
  %v1133 = vunpack.c.l.b16 %v837
  %v1134 = vunpack.c.h.b16 %v837
  %v1135 = vunpack.c.l.b16 %v838
  %v1136 = vunpack.c.h.b16 %v838
  %v1137 = vunpack.c.l.b16 %v839
  %v1138 = vunpack.c.h.b16 %v839
  %v1139 = vunpack.c.l.b16 %v840
  %v1140 = vunpack.c.h.b16 %v840
  %v1141 = vunpack.c.l.b16 %v841
  %v1142 = vunpack.c.h.b16 %v841
  %v1143 = vunpack.c.l.b16 %v842
  %v1144 = vunpack.c.h.b16 %v842
  %v1145 = vunpack.c.l.b16 %v843
  %v1146 = vunpack.c.h.b16 %v843
  %v1147 = vunpack.c.l.b16 %v844
  %v1148 = vunpack.c.h.b16 %v844
  %v1149 = vunpack.c.l.b16 %v845
  %v1150 = vunpack.c.h.b16 %v845
  %v1151 = vunpack.c.l.b16 %v846
  %v1152 = vunpack.c.h.b16 %v846
  %v1153 = vunpack.c.l.b16 %v847
  %v1154 = vunpack.c.h.b16 %v847
  %v1155 = vunpack.c.l.b16 %v848
  %v1156 = vunpack.c.h.b16 %v848
  %v1157 = vunpack.c.l.b16 %v849
  %v1158 = vunpack.c.h.b16 %v849
  %v1159 = vunpack.c.l.b16 %v850
  %v1160 = vunpack.c.h.b16 %v850
  %v1161 = vunpack.c.l.b16 %v851
  %v1162 = vunpack.c.h.b16 %v851
  %v1163 = vunpack.c.l.b16 %v852
  %v1164 = vunpack.c.h.b16 %v852
  %v1165 = vunpack.c.l.b16 %v853
  %v1166 = vunpack.c.h.b16 %v853
  %v1167 = vunpack.c.l.b16 %v854
  %v1168 = vunpack.c.h.b16 %v854
  %v1169 = vunpack.c.l.b16 %v855
  %v1170 = vunpack.c.h.b16 %v855
  %v1171 = vunpack.c.l.b16 %v856
  %v1172 = vunpack.c.h.b16 %v856
  %v1173 = vunpack.c.l.b16 %v857
  %v1174 = vunpack.c.h.b16 %v857
  %v1175 = vunpack.c.l.b16 %v858
  %v1176 = vunpack.c.h.b16 %v858
  %v1177 = vunpack.c.l.b16 %v859
  %v1178 = vunpack.c.h.b16 %v859
  %v1179 = vunpack.c.l.b16 %v860
  %v1180 = vunpack.c.h.b16 %v860
  %v1181 = vunpack.c.l.b16 %v861
  %v1182 = vunpack.c.h.b16 %v861
  %v1183 = vunpack.c.l.b16 %v862
  %v1184 = vunpack.c.h.b16 %v862
  %v1185 = vunpack.c.l.b16 %v863
  %v1186 = vunpack.c.h.b16 %v863
  %v1187 = vunpack.c.l.b16 %v864
  %v1188 = vunpack.c.h.b16 %v864
  %v1189 = vunpack.c.l.b16 %v865
  %v1190 = vunpack.c.h.b16 %v865
  %v1191 = vunpack.c.l.b16 %v866
  %v1192 = vunpack.c.h.b16 %v866
  %v1193 = vunpack.c.l.b16 %v867
  %v1194 = vunpack.c.h.b16 %v867
  %v1195 = vunpack.c.l.b16 %v868
  %v1196 = vunpack.c.h.b16 %v868
  %v1197 = vunpack.c.l.b16 %v869
  %v1198 = vunpack.c.h.b16 %v869
  %v1199 = vunpack.c.l.b16 %v870
  %v1200 = vunpack.c.h.b16 %v870
  %v1201 = vunpack.c.l.b16 %v871
  %v1202 = vunpack.c.h.b16 %v871
  %v1203 = vunpack.c.l.b16 %v872
  %v1204 = vunpack.c.h.b16 %v872
  %v1205 = vunpack.c.l.b16 %v873
  %v1206 = vunpack.c.h.b16 %v873
  %v1207 = vunpack.c.l.b16 %v874
  %v1208 = vunpack.c.h.b16 %v874
  %v1209 = vunpack.c.l.b16 %v875
  %v1210 = vunpack.c.h.b16 %v875
  %v1211 = vunpack.c.l.b16 %v876
  %v1212 = vunpack.c.h.b16 %v876
  %v1213 = vunpack.c.l.b16 %v877
  %v1214 = vunpack.c.h.b16 %v877
  %v1215 = vunpack.c.l.b16 %v878
  %v1216 = vunpack.c.h.b16 %v878
  %v1217 = vunpack.c.l.b16 %v879
  %v1218 = vunpack.c.h.b16 %v879
  %v1219 = vunpack.c.l.b16 %v880
  %v1220 = vunpack.c.h.b16 %v880
  %v1221 = vunpack.c.l.b16 %v881
  %v1222 = vunpack.c.h.b16 %v881
  %v1223 = vunpack.c.l.b16 %v882
  %v1224 = vunpack.c.h.b16 %v882
  %v1225 = vunpack.c.l.b16 %v883
  %v1226 = vunpack.c.h.b16 %v883
  %v1227 = vunpack.c.l.b16 %v884
  %v1228 = vunpack.c.h.b16 %v884
  %v1229 = vunpack.c.l.b16 %v885
  %v1230 = vunpack.c.h.b16 %v885
  %v1231 = vunpack.c.l.b16 %v886
  %v1232 = vunpack.c.h.b16 %v886
  %v1233 = vunpack.c.l.b16 %v887
  %v1234 = vunpack.c.h.b16 %v887
  %v1235 = vunpack.c.l.b16 %v888
  %v1236 = vunpack.c.h.b16 %v888
  %v1237 = vunpack.c.l.b16 %v889
  %v1238 = vunpack.c.h.b16 %v889
  %v1239 = vunpack.c.l.b16 %v890
  %v1240 = vunpack.c.h.b16 %v890
  %v1241 = vunpack.c.l.b16 %v891
  %v1242 = vunpack.c.h.b16 %v891
  %v1243 = vunpack.c.l.b16 %v892
  %v1244 = vunpack.c.h.b16 %v892
  %v1245 = vunpack.c.l.b16 %v893
  %v1246 = vunpack.c.h.b16 %v893
  %v1247 = vunpack.c.l.b16 %v894
  %v1248 = vunpack.c.h.b16 %v894
  %v1249 = vunpack.c.l.b16 %v895
  %v1250 = vunpack.c.h.b16 %v895
  %v1251 = vunpack.c.l.b16 %v896
  %v1252 = vunpack.c.h.b16 %v896
  %v1253 = vunpack.c.l.b16 %v897
  %v1254 = vunpack.c.h.b16 %v897
  %v1255 = vunpack.c.l.b16 %v898
  %v1256 = vunpack.c.h.b16 %v898
  %v1257 = vunpack.c.l.b16 %v899
  %v1258 = vunpack.c.h.b16 %v899
  %v1259 = vunpack.c.l.b16 %v900
  %v1260 = vunpack.c.h.b16 %v900
  %v1261 = vunpack.c.l.b16 %v901
  %v1262 = vunpack.c.h.b16 %v901
  %v1263 = vunpack.c.l.b16 %v902
  %v1264 = vunpack.c.h.b16 %v902
  %v1265 = vunpack.c.l.b16 %v903
  %v1266 = vunpack.c.h.b16 %v903
  %v1267 = vunpack.c.l.b16 %v904
  %v1268 = vunpack.c.h.b16 %v904
  %v1269 = vunpack.c.l.b16 %v905
  %v1270 = vunpack.c.h.b16 %v905
  %v1271 = vunpack.c.l.b16 %v906
  %v1272 = vunpack.c.h.b16 %v906
  %v1273 = vunpack.c.l.b16 %v907
  %v1274 = vunpack.c.h.b16 %v907
  %v1275 = vunpack.c.l.b16 %v908
  %v1276 = vunpack.c.h.b16 %v908
  %v1277 = vunpack.c.l.b16 %v909
  %v1278 = vunpack.c.h.b16 %v909
  %v1279 = vunpack.c.l.b16 %v910
  %v1280 = vunpack.c.h.b16 %v910
  %v1281 = vunpack.c.l.b16 %v911
  %v1282 = vunpack.c.h.b16 %v911
  %v1283 = vunpack.c.l.b16 %v912
  %v1284 = vunpack.c.h.b16 %v912
  %v1285 = vunpack.c.l.b16 %v913
  %v1286 = vunpack.c.h.b16 %v913
  %v1287 = vunpack.c.l.b16 %v914
  %v1288 = vunpack.c.h.b16 %v914
  %v1289 = vunpack.c.l.b16 %v915
  %v1290 = vunpack.c.h.b16 %v915
  %v1291 = vunpack.c.l.b16 %v916
  %v1292 = vunpack.c.h.b16 %v916
  %v1293 = vunpack.c.l.b16 %v917
  %v1294 = vunpack.c.h.b16 %v917
  %v1295 = vunpack.c.l.b16 %v918
  %v1296 = vunpack.c.h.b16 %v918
  %v1297 = vunpack.c.l.b16 %v919
  %v1298 = vunpack.c.h.b16 %v919
  %v1299 = vunpack.c.l.b16 %v920
  %v1300 = vunpack.c.h.b16 %v920
  %v1301 = vunpack.c.l.b16 %v921
  %v1302 = vunpack.c.h.b16 %v921
  %v1303 = vunpack.c.l.b16 %v922
  %v1304 = vunpack.c.h.b16 %v922
  %v1305 = vunpack.c.l.b16 %v923
  %v1306 = vunpack.c.h.b16 %v923
  %v1307 = vunpack.c.l.b16 %v924
  %v1308 = vunpack.c.h.b16 %v924
  %v1309 = vunpack.c.l.b16 %v925
  %v1310 = vunpack.c.h.b16 %v925
  %v1311 = vunpack.c.l.b16 %v926
  %v1312 = vunpack.c.h.b16 %v926
  %v1313 = vunpack.c.l.b16 %v927
  %v1314 = vunpack.c.h.b16 %v927
  %v1315 = vunpack.c.l.b16 %v928
  %v1316 = vunpack.c.h.b16 %v928
  %v1317 = vunpack.c.l.b16 %v929
  %v1318 = vunpack.c.h.b16 %v929
  %v1319 = vunpack.c.l.b16 %v930
  %v1320 = vunpack.c.h.b16 %v930
  %v1321 = vunpack.c.l.b16 %v931
  %v1322 = vunpack.c.h.b16 %v931
  %v1323 = vunpack.c.l.b16 %v932
  %v1324 = vunpack.c.h.b16 %v932
  %v1325 = vunpack.c.l.b16 %v933
  %v1326 = vunpack.c.h.b16 %v933
  %v1327 = vunpack.c.l.b16 %v934
  %v1328 = vunpack.c.h.b16 %v934
  %v1329 = vpack.c.b16 %v1077, %v1073
  %v1330 = vpack.c.b16 %v1078, %v1074
  %v1331 = vpack.c.b16 %v1079, %v1075
  %v1332 = vpack.c.b16 %v1080, %v1076
  %v1333 = vpack.c.b16 %v1085, %v1081
  %v1334 = vpack.c.b16 %v1086, %v1082
  %v1335 = vpack.c.b16 %v1087, %v1083
  %v1336 = vpack.c.b16 %v1088, %v1084
  %v1337 = vpack.c.b16 %v1093, %v1089
  %v1338 = vpack.c.b16 %v1094, %v1090
  %v1339 = vpack.c.b16 %v1095, %v1091
  %v1340 = vpack.c.b16 %v1096, %v1092
  %v1341 = vpack.c.b16 %v1101, %v1097
  %v1342 = vpack.c.b16 %v1102, %v1098
  %v1343 = vpack.c.b16 %v1103, %v1099
  %v1344 = vpack.c.b16 %v1104, %v1100
  %v1345 = vpack.c.b16 %v1109, %v1105
  %v1346 = vpack.c.b16 %v1110, %v1106
  %v1347 = vpack.c.b16 %v1111, %v1107
  %v1348 = vpack.c.b16 %v1112, %v1108
  %v1349 = vpack.c.b16 %v1117, %v1113
  %v1350 = vpack.c.b16 %v1118, %v1114
  %v1351 = vpack.c.b16 %v1119, %v1115
  %v1352 = vpack.c.b16 %v1120, %v1116
  %v1353 = vpack.c.b16 %v1125, %v1121
  %v1354 = vpack.c.b16 %v1126, %v1122
  %v1355 = vpack.c.b16 %v1127, %v1123
  %v1356 = vpack.c.b16 %v1128, %v1124
  %v1357 = vpack.c.b16 %v1133, %v1129
  %v1358 = vpack.c.b16 %v1134, %v1130
  %v1359 = vpack.c.b16 %v1135, %v1131
  %v1360 = vpack.c.b16 %v1136, %v1132
  %v1361 = vpack.c.b16 %v1141, %v1137
  %v1362 = vpack.c.b16 %v1142, %v1138
  %v1363 = vpack.c.b16 %v1143, %v1139
  %v1364 = vpack.c.b16 %v1144, %v1140
  %v1365 = vpack.c.b16 %v1149, %v1145
  %v1366 = vpack.c.b16 %v1150, %v1146
  %v1367 = vpack.c.b16 %v1151, %v1147
  %v1368 = vpack.c.b16 %v1152, %v1148
  %v1369 = vpack.c.b16 %v1157, %v1153
  %v1370 = vpack.c.b16 %v1158, %v1154
  %v1371 = vpack.c.b16 %v1159, %v1155
  %v1372 = vpack.c.b16 %v1160, %v1156
  %v1373 = vpack.c.b16 %v1165, %v1161
  %v1374 = vpack.c.b16 %v1166, %v1162
  %v1375 = vpack.c.b16 %v1167, %v1163
  %v1376 = vpack.c.b16 %v1168, %v1164
  %v1377 = vpack.c.b16 %v1173, %v1169
  %v1378 = vpack.c.b16 %v1174, %v1170
  %v1379 = vpack.c.b16 %v1175, %v1171
  %v1380 = vpack.c.b16 %v1176, %v1172
  %v1381 = vpack.c.b16 %v1181, %v1177
  %v1382 = vpack.c.b16 %v1182, %v1178
  %v1383 = vpack.c.b16 %v1183, %v1179
  %v1384 = vpack.c.b16 %v1184, %v1180
  %v1385 = vpack.c.b16 %v1189, %v1185
  %v1386 = vpack.c.b16 %v1190, %v1186
  %v1387 = vpack.c.b16 %v1191, %v1187
  %v1388 = vpack.c.b16 %v1192, %v1188
  %v1389 = vpack.c.b16 %v1197, %v1193
  %v1390 = vpack.c.b16 %v1198, %v1194
  %v1391 = vpack.c.b16 %v1199, %v1195
  %v1392 = vpack.c.b16 %v1200, %v1196
  %v1393 = vpack.c.b16 %v1205, %v1201
  %v1394 = vpack.c.b16 %v1206, %v1202
  %v1395 = vpack.c.b16 %v1207, %v1203
  %v1396 = vpack.c.b16 %v1208, %v1204
  %v1397 = vpack.c.b16 %v1213, %v1209
  %v1398 = vpack.c.b16 %v1214, %v1210
  %v1399 = vpack.c.b16 %v1215, %v1211
  %v1400 = vpack.c.b16 %v1216, %v1212
  %v1401 = vpack.c.b16 %v1221, %v1217
  %v1402 = vpack.c.b16 %v1222, %v1218
  %v1403 = vpack.c.b16 %v1223, %v1219
  %v1404 = vpack.c.b16 %v1224, %v1220
  %v1405 = vpack.c.b16 %v1229, %v1225
  %v1406 = vpack.c.b16 %v1230, %v1226
  %v1407 = vpack.c.b16 %v1231, %v1227
  %v1408 = vpack.c.b16 %v1232, %v1228
  %v1409 = vpack.c.b16 %v1237, %v1233
  %v1410 = vpack.c.b16 %v1238, %v1234
  %v1411 = vpack.c.b16 %v1239, %v1235
  %v1412 = vpack.c.b16 %v1240, %v1236
  %v1413 = vpack.c.b16 %v1245, %v1241
  %v1414 = vpack.c.b16 %v1246, %v1242
  %v1415 = vpack.c.b16 %v1247, %v1243
  %v1416 = vpack.c.b16 %v1248, %v1244
  %v1417 = vpack.c.b16 %v1253, %v1249
  %v1418 = vpack.c.b16 %v1254, %v1250
  %v1419 = vpack.c.b16 %v1255, %v1251
  %v1420 = vpack.c.b16 %v1256, %v1252
  %v1421 = vpack.c.b16 %v1261, %v1257
  %v1422 = vpack.c.b16 %v1262, %v1258
  %v1423 = vpack.c.b16 %v1263, %v1259
  %v1424 = vpack.c.b16 %v1264, %v1260
  %v1425 = vpack.c.b16 %v1269, %v1265
  %v1426 = vpack.c.b16 %v1270, %v1266
  %v1427 = vpack.c.b16 %v1271, %v1267
  %v1428 = vpack.c.b16 %v1272, %v1268
  %v1429 = vpack.c.b16 %v1277, %v1273
  %v1430 = vpack.c.b16 %v1278, %v1274
  %v1431 = vpack.c.b16 %v1279, %v1275
  %v1432 = vpack.c.b16 %v1280, %v1276
  %v1433 = vpack.c.b16 %v1285, %v1281
  %v1434 = vpack.c.b16 %v1286, %v1282
  %v1435 = vpack.c.b16 %v1287, %v1283
  %v1436 = vpack.c.b16 %v1288, %v1284
  %v1437 = vpack.c.b16 %v1293, %v1289
  %v1438 = vpack.c.b16 %v1294, %v1290
  %v1439 = vpack.c.b16 %v1295, %v1291
  %v1440 = vpack.c.b16 %v1296, %v1292
  %v1441 = vpack.c.b16 %v1301, %v1297
  %v1442 = vpack.c.b16 %v1302, %v1298
  %v1443 = vpack.c.b16 %v1303, %v1299
  %v1444 = vpack.c.b16 %v1304, %v1300
  %v1445 = vpack.c.b16 %v1309, %v1305
  %v1446 = vpack.c.b16 %v1310, %v1306
  %v1447 = vpack.c.b16 %v1311, %v1307
  %v1448 = vpack.c.b16 %v1312, %v1308
  %v1449 = vpack.c.b16 %v1317, %v1313
  %v1450 = vpack.c.b16 %v1318, %v1314
  %v1451 = vpack.c.b16 %v1319, %v1315
  %v1452 = vpack.c.b16 %v1320, %v1316
  %v1453 = vpack.c.b16 %v1325, %v1321
  %v1454 = vpack.c.b16 %v1326, %v1322
  %v1455 = vpack.c.b16 %v1327, %v1323
  %v1456 = vpack.c.b16 %v1328, %v1324
  %1585 = vmatpush.bf16.msra.mxu0 %v1357
  %1586 = vmatpush.bf16.msra.mxu0 %v1353
  %1587 = vmatpush.bf16.msra.mxu0 %v1349
  %1588 = vmatpush.bf16.msra.mxu0 %v1345
  %1589 = vmatpush.bf16.msra.mxu0 %v1341
  %1590 = vmatpush.bf16.msra.mxu0 %v1337
  %1591 = vmatpush.bf16.msra.mxu0 %v1333
  %1592 = vmatpush.bf16.msra.mxu0 %v1329
  %1593 = vmatmul.bf16.gmra.mxu0 %v803
  %v1594 = vpop.f32.mrf.mxu0
  %v1595 = vadd.f32 %v937, %v1594
  %v1596 = vpop.f32.mrf.mxu0
  %1597 = vdwg.mxu0
  %1598 = vmatpush.bf16.msra.mxu0 %v1389
  %1599 = vmatpush.bf16.msra.mxu0 %v1385
  %1600 = vmatpush.bf16.msra.mxu0 %v1381
  %1601 = vmatpush.bf16.msra.mxu0 %v1377
  %1602 = vmatpush.bf16.msra.mxu0 %v1373
  %1603 = vmatpush.bf16.msra.mxu0 %v1369
  %1604 = vmatpush.bf16.msra.mxu0 %v1365
  %1605 = vmatpush.bf16.msra.mxu0 %v1361
  %1606 = vmatmul.bf16.gmra.mxu0 %v804
  %v1607 = vpop.f32.mrf.mxu0
  %v1608 = vadd.f32 %v1595, %v1607
  %v1609 = vpop.f32.mrf.mxu0
  %1610 = vdwg.mxu0
  %1611 = vmatpush.bf16.msra.mxu0 %v1421
  %1612 = vmatpush.bf16.msra.mxu0 %v1417
  %1613 = vmatpush.bf16.msra.mxu0 %v1413
  %1614 = vmatpush.bf16.msra.mxu0 %v1409
  %1615 = vmatpush.bf16.msra.mxu0 %v1405
  %1616 = vmatpush.bf16.msra.mxu0 %v1401
  %1617 = vmatpush.bf16.msra.mxu0 %v1397
  %1618 = vmatpush.bf16.msra.mxu0 %v1393
  %1619 = vmatmul.bf16.gmra.mxu0 %v805
  %v1620 = vpop.f32.mrf.mxu0
  %v1621 = vadd.f32 %v1608, %v1620
  %v1622 = vpop.f32.mrf.mxu0
  %1623 = vdwg.mxu0
  %1624 = vmatpush.bf16.msra.mxu0 %v1453
  %1625 = vmatpush.bf16.msra.mxu0 %v1449
  %1626 = vmatpush.bf16.msra.mxu0 %v1445
  %1627 = vmatpush.bf16.msra.mxu0 %v1441
  %1628 = vmatpush.bf16.msra.mxu0 %v1437
  %1629 = vmatpush.bf16.msra.mxu0 %v1433
  %1630 = vmatpush.bf16.msra.mxu0 %v1429
  %1631 = vmatpush.bf16.msra.mxu0 %v1425
  %1632 = vmatmul.bf16.gmra.mxu0 %v806
  %v1633 = vpop.f32.mrf.mxu0
  %v1634 = vadd.f32 %v1621, %v1633
  %v1635 = vpop.f32.mrf.mxu0
  %1636 = vdwg.mxu0
  %1637 = vmatpush.bf16.msra.mxu0 %v1358
  %1638 = vmatpush.bf16.msra.mxu0 %v1354
  %1639 = vmatpush.bf16.msra.mxu0 %v1350
  %1640 = vmatpush.bf16.msra.mxu0 %v1346
  %1641 = vmatpush.bf16.msra.mxu0 %v1342
  %1642 = vmatpush.bf16.msra.mxu0 %v1338
  %1643 = vmatpush.bf16.msra.mxu0 %v1334
  %1644 = vmatpush.bf16.msra.mxu0 %v1330
  %1645 = vmatmul.bf16.gmra.mxu0 %v803
  %v1646 = vpop.f32.mrf.mxu0
  %v1647 = vadd.f32 %v938, %v1646
  %v1648 = vpop.f32.mrf.mxu0
  %1649 = vdwg.mxu0
  %1650 = vmatpush.bf16.msra.mxu0 %v1390
  %1651 = vmatpush.bf16.msra.mxu0 %v1386
  %1652 = vmatpush.bf16.msra.mxu0 %v1382
  %1653 = vmatpush.bf16.msra.mxu0 %v1378
  %1654 = vmatpush.bf16.msra.mxu0 %v1374
  %1655 = vmatpush.bf16.msra.mxu0 %v1370
  %1656 = vmatpush.bf16.msra.mxu0 %v1366
  %1657 = vmatpush.bf16.msra.mxu0 %v1362
  %1658 = vmatmul.bf16.gmra.mxu0 %v804
  %v1659 = vpop.f32.mrf.mxu0
  %v1660 = vadd.f32 %v1647, %v1659
  %v1661 = vpop.f32.mrf.mxu0
  %1662 = vdwg.mxu0
  %1663 = vmatpush.bf16.msra.mxu0 %v1422
  %1664 = vmatpush.bf16.msra.mxu0 %v1418
  %1665 = vmatpush.bf16.msra.mxu0 %v1414
  %1666 = vmatpush.bf16.msra.mxu0 %v1410
  %1667 = vmatpush.bf16.msra.mxu0 %v1406
  %1668 = vmatpush.bf16.msra.mxu0 %v1402
  %1669 = vmatpush.bf16.msra.mxu0 %v1398
  %1670 = vmatpush.bf16.msra.mxu0 %v1394
  %1671 = vmatmul.bf16.gmra.mxu0 %v805
  %v1672 = vpop.f32.mrf.mxu0
  %v1673 = vadd.f32 %v1660, %v1672
  %v1674 = vpop.f32.mrf.mxu0
  %1675 = vdwg.mxu0
  %1676 = vmatpush.bf16.msra.mxu0 %v1454
  %1677 = vmatpush.bf16.msra.mxu0 %v1450
  %1678 = vmatpush.bf16.msra.mxu0 %v1446
  %1679 = vmatpush.bf16.msra.mxu0 %v1442
  %1680 = vmatpush.bf16.msra.mxu0 %v1438
  %1681 = vmatpush.bf16.msra.mxu0 %v1434
  %1682 = vmatpush.bf16.msra.mxu0 %v1430
  %1683 = vmatpush.bf16.msra.mxu0 %v1426
  %1684 = vmatmul.bf16.gmra.mxu0 %v806
  %v1685 = vpop.f32.mrf.mxu0
  %v1686 = vadd.f32 %v1673, %v1685
  %v1687 = vpop.f32.mrf.mxu0
  %1688 = vdwg.mxu0
  %1689 = vmatpush.bf16.msra.mxu0 %v1359
  %1690 = vmatpush.bf16.msra.mxu0 %v1355
  %1691 = vmatpush.bf16.msra.mxu0 %v1351
  %1692 = vmatpush.bf16.msra.mxu0 %v1347
  %1693 = vmatpush.bf16.msra.mxu0 %v1343
  %1694 = vmatpush.bf16.msra.mxu0 %v1339
  %1695 = vmatpush.bf16.msra.mxu0 %v1335
  %1696 = vmatpush.bf16.msra.mxu0 %v1331
  %1697 = vmatmul.bf16.gmra.mxu0 %v803
  %v1698 = vpop.f32.mrf.mxu0
  %v1699 = vadd.f32 %v939, %v1698
  %v1700 = vpop.f32.mrf.mxu0
  %1701 = vdwg.mxu0
  %1702 = vmatpush.bf16.msra.mxu0 %v1391
  %1703 = vmatpush.bf16.msra.mxu0 %v1387
  %1704 = vmatpush.bf16.msra.mxu0 %v1383
  %1705 = vmatpush.bf16.msra.mxu0 %v1379
  %1706 = vmatpush.bf16.msra.mxu0 %v1375
  %1707 = vmatpush.bf16.msra.mxu0 %v1371
  %1708 = vmatpush.bf16.msra.mxu0 %v1367
  %1709 = vmatpush.bf16.msra.mxu0 %v1363
  %1710 = vmatmul.bf16.gmra.mxu0 %v804
  %v1711 = vpop.f32.mrf.mxu0
  %v1712 = vadd.f32 %v1699, %v1711
  %v1713 = vpop.f32.mrf.mxu0
  %1714 = vdwg.mxu0
  %1715 = vmatpush.bf16.msra.mxu0 %v1423
  %1716 = vmatpush.bf16.msra.mxu0 %v1419
  %1717 = vmatpush.bf16.msra.mxu0 %v1415
  %1718 = vmatpush.bf16.msra.mxu0 %v1411
  %1719 = vmatpush.bf16.msra.mxu0 %v1407
  %1720 = vmatpush.bf16.msra.mxu0 %v1403
  %1721 = vmatpush.bf16.msra.mxu0 %v1399
  %1722 = vmatpush.bf16.msra.mxu0 %v1395
  %1723 = vmatmul.bf16.gmra.mxu0 %v805
  %v1724 = vpop.f32.mrf.mxu0
  %v1725 = vadd.f32 %v1712, %v1724
  %v1726 = vpop.f32.mrf.mxu0
  %1727 = vdwg.mxu0
  %1728 = vmatpush.bf16.msra.mxu0 %v1455
  %1729 = vmatpush.bf16.msra.mxu0 %v1451
  %1730 = vmatpush.bf16.msra.mxu0 %v1447
  %1731 = vmatpush.bf16.msra.mxu0 %v1443
  %1732 = vmatpush.bf16.msra.mxu0 %v1439
  %1733 = vmatpush.bf16.msra.mxu0 %v1435
  %1734 = vmatpush.bf16.msra.mxu0 %v1431
  %1735 = vmatpush.bf16.msra.mxu0 %v1427
  %1736 = vmatmul.bf16.gmra.mxu0 %v806
  %v1737 = vpop.f32.mrf.mxu0
  %v1738 = vadd.f32 %v1725, %v1737
  %v1739 = vpop.f32.mrf.mxu0
  %1740 = vdwg.mxu0
  %1741 = vmatpush.bf16.msra.mxu0 %v1360
  %1742 = vmatpush.bf16.msra.mxu0 %v1356
  %1743 = vmatpush.bf16.msra.mxu0 %v1352
  %1744 = vmatpush.bf16.msra.mxu0 %v1348
  %1745 = vmatpush.bf16.msra.mxu0 %v1344
  %1746 = vmatpush.bf16.msra.mxu0 %v1340
  %1747 = vmatpush.bf16.msra.mxu0 %v1336
  %1748 = vmatpush.bf16.msra.mxu0 %v1332
  %1749 = vmatmul.bf16.gmra.mxu0 %v803
  %v1750 = vpop.f32.mrf.mxu0
  %v1751 = vadd.f32 %v940, %v1750
  %v1752 = vpop.f32.mrf.mxu0
  %1753 = vdwg.mxu0
  %1754 = vmatpush.bf16.msra.mxu0 %v1392
  %1755 = vmatpush.bf16.msra.mxu0 %v1388
  %1756 = vmatpush.bf16.msra.mxu0 %v1384
  %1757 = vmatpush.bf16.msra.mxu0 %v1380
  %1758 = vmatpush.bf16.msra.mxu0 %v1376
  %1759 = vmatpush.bf16.msra.mxu0 %v1372
  %1760 = vmatpush.bf16.msra.mxu0 %v1368
  %1761 = vmatpush.bf16.msra.mxu0 %v1364
  %1762 = vmatmul.bf16.gmra.mxu0 %v804
  %v1763 = vpop.f32.mrf.mxu0
  %v1764 = vadd.f32 %v1751, %v1763
  %v1765 = vpop.f32.mrf.mxu0
  %1766 = vdwg.mxu0
  %1767 = vmatpush.bf16.msra.mxu0 %v1424
  %1768 = vmatpush.bf16.msra.mxu0 %v1420
  %1769 = vmatpush.bf16.msra.mxu0 %v1416
  %1770 = vmatpush.bf16.msra.mxu0 %v1412
  %1771 = vmatpush.bf16.msra.mxu0 %v1408
  %1772 = vmatpush.bf16.msra.mxu0 %v1404
  %1773 = vmatpush.bf16.msra.mxu0 %v1400
  %1774 = vmatpush.bf16.msra.mxu0 %v1396
  %1775 = vmatmul.bf16.gmra.mxu0 %v805
  %v1776 = vpop.f32.mrf.mxu0
  %v1777 = vadd.f32 %v1764, %v1776
  %v1778 = vpop.f32.mrf.mxu0
  %1779 = vdwg.mxu0
  %1780 = vmatpush.bf16.msra.mxu0 %v1456
  %1781 = vmatpush.bf16.msra.mxu0 %v1452
  %1782 = vmatpush.bf16.msra.mxu0 %v1448
  %1783 = vmatpush.bf16.msra.mxu0 %v1444
  %1784 = vmatpush.bf16.msra.mxu0 %v1440
  %1785 = vmatpush.bf16.msra.mxu0 %v1436
  %1786 = vmatpush.bf16.msra.mxu0 %v1432
  %1787 = vmatpush.bf16.msra.mxu0 %v1428
  %1788 = vmatmul.bf16.gmra.mxu0 %v806
  %v1789 = vpop.f32.mrf.mxu0
  %v1790 = vadd.f32 %v1777, %v1789
  %v1791 = vpop.f32.mrf.mxu0
  %1792 = vdwg.mxu0
  %v1793 = vmul.f32 %v1634, 0.2
  %v1794 = vmul.f32 %v1686, 0.2
  %v1795 = vmul.f32 %v1738, 0.2
  %v1796 = vmul.f32 %v1790, 0.2
  %v1797 = vmax.f32 %v1634, %v1793
  %v1798 = vmax.f32 %v1686, %v1794
  %v1799 = vmax.f32 %v1738, %v1795
  %v1800 = vmax.f32 %v1790, %v1796
  %v1801 = vpack.c.bf16 %v1797, %v1797
  %v1802 = vpack.c.bf16 %v1798, %v1798
  %v1803 = vpack.c.bf16 %v1799, %v1799
  %v1804 = vpack.c.bf16 %v1800, %v1800
  %v1805 = vld [vmem:[%s7] sm:$0xff]
  %v1806 = vld [vmem:[%s7 + $0x8] sm:$0xff]
  %v1807 = vld [vmem:[%s7 + $0x10] sm:$0xff]
  %v1808 = vld [vmem:[%s7 + $0x18] sm:$0xff]
  %v1809 = vld [vmem:[%s7 + $0x20] sm:$0xff]
  %v1810 = vld [vmem:[%s7 + $0x28] sm:$0xff]
  %v1811 = vld [vmem:[%s7 + $0x30] sm:$0xff]
  %v1812 = vld [vmem:[%s7 + $0x38] sm:$0xff]
  %v1813 = vld [vmem:[%s7 + $0x40] sm:$0xff]
  %v1814 = vld [vmem:[%s7 + $0x48] sm:$0xff]
  %v1815 = vld [vmem:[%s7 + $0x50] sm:$0xff]
  %v1816 = vld [vmem:[%s7 + $0x58] sm:$0xff]
  %v1817 = vld [vmem:[%s7 + $0x60] sm:$0xff]
  %v1818 = vld [vmem:[%s7 + $0x68] sm:$0xff]
  %v1819 = vld [vmem:[%s7 + $0x70] sm:$0xff]
  %v1820 = vld [vmem:[%s7 + $0x78] sm:$0xff]
  %v1821 = vld [vmem:[%s7 + $0x80] sm:$0xff]
  %v1822 = vld [vmem:[%s7 + $0x88] sm:$0xff]
  %v1823 = vld [vmem:[%s7 + $0x90] sm:$0xff]
  %v1824 = vld [vmem:[%s7 + $0x98] sm:$0xff]
  %v1825 = vld [vmem:[%s7 + $0xa0] sm:$0xff]
  %v1826 = vld [vmem:[%s7 + $0xa8] sm:$0xff]
  %v1827 = vld [vmem:[%s7 + $0xb0] sm:$0xff]
  %v1828 = vld [vmem:[%s7 + $0xb8] sm:$0xff]
  %v1829 = vld [vmem:[%s7 + $0xc0] sm:$0xff]
  %v1830 = vld [vmem:[%s7 + $0xc8] sm:$0xff]
  %v1831 = vld [vmem:[%s7 + $0xd0] sm:$0xff]
  %v1832 = vld [vmem:[%s7 + $0xd8] sm:$0xff]
  %v1833 = vld [vmem:[%s7 + $0xe0] sm:$0xff]
  %v1834 = vld [vmem:[%s7 + $0xe8] sm:$0xff]
  %v1835 = vld [vmem:[%s7 + $0xf0] sm:$0xff]
  %v1836 = vld [vmem:[%s7 + $0xf8] sm:$0xff]
  %v1837 = vld [vmem:[%s7 + $0x100] sm:$0xff]
  %v1838 = vld [vmem:[%s7 + $0x108] sm:$0xff]
  %v1839 = vld [vmem:[%s7 + $0x110] sm:$0xff]
  %v1840 = vld [vmem:[%s7 + $0x118] sm:$0xff]
  %v1841 = vld [vmem:[%s7 + $0x120] sm:$0xff]
  %v1842 = vld [vmem:[%s7 + $0x128] sm:$0xff]
  %v1843 = vld [vmem:[%s7 + $0x130] sm:$0xff]
  %v1844 = vld [vmem:[%s7 + $0x138] sm:$0xff]
  %v1845 = vld [vmem:[%s7 + $0x140] sm:$0xff]
  %v1846 = vld [vmem:[%s7 + $0x148] sm:$0xff]
  %v1847 = vld [vmem:[%s7 + $0x150] sm:$0xff]
  %v1848 = vld [vmem:[%s7 + $0x158] sm:$0xff]
  %v1849 = vld [vmem:[%s7 + $0x160] sm:$0xff]
  %v1850 = vld [vmem:[%s7 + $0x168] sm:$0xff]
  %v1851 = vld [vmem:[%s7 + $0x170] sm:$0xff]
  %v1852 = vld [vmem:[%s7 + $0x178] sm:$0xff]
  %v1853 = vld [vmem:[%s7 + $0x180] sm:$0xff]
  %v1854 = vld [vmem:[%s7 + $0x188] sm:$0xff]
  %v1855 = vld [vmem:[%s7 + $0x190] sm:$0xff]
  %v1856 = vld [vmem:[%s7 + $0x198] sm:$0xff]
  %v1857 = vld [vmem:[%s7 + $0x1a0] sm:$0xff]
  %v1858 = vld [vmem:[%s7 + $0x1a8] sm:$0xff]
  %v1859 = vld [vmem:[%s7 + $0x1b0] sm:$0xff]
  %v1860 = vld [vmem:[%s7 + $0x1b8] sm:$0xff]
  %v1861 = vld [vmem:[%s7 + $0x1c0] sm:$0xff]
  %v1862 = vld [vmem:[%s7 + $0x1c8] sm:$0xff]
  %v1863 = vld [vmem:[%s7 + $0x1d0] sm:$0xff]
  %v1864 = vld [vmem:[%s7 + $0x1d8] sm:$0xff]
  %v1865 = vld [vmem:[%s7 + $0x1e0] sm:$0xff]
  %v1866 = vld [vmem:[%s7 + $0x1e8] sm:$0xff]
  %v1867 = vld [vmem:[%s7 + $0x1f0] sm:$0xff]
  %v1868 = vld [vmem:[%s7 + $0x1f8] sm:$0xff]
  %v1869 = vld [vmem:[%s7 + $0x200] sm:$0xff]
  %v1870 = vld [vmem:[%s7 + $0x208] sm:$0xff]
  %v1871 = vld [vmem:[%s7 + $0x210] sm:$0xff]
  %v1872 = vld [vmem:[%s7 + $0x218] sm:$0xff]
  %v1873 = vld [vmem:[%s7 + $0x220] sm:$0xff]
  %v1874 = vld [vmem:[%s7 + $0x228] sm:$0xff]
  %v1875 = vld [vmem:[%s7 + $0x230] sm:$0xff]
  %v1876 = vld [vmem:[%s7 + $0x238] sm:$0xff]
  %v1877 = vld [vmem:[%s7 + $0x240] sm:$0xff]
  %v1878 = vld [vmem:[%s7 + $0x248] sm:$0xff]
  %v1879 = vld [vmem:[%s7 + $0x250] sm:$0xff]
  %v1880 = vld [vmem:[%s7 + $0x258] sm:$0xff]
  %v1881 = vld [vmem:[%s7 + $0x260] sm:$0xff]
  %v1882 = vld [vmem:[%s7 + $0x268] sm:$0xff]
  %v1883 = vld [vmem:[%s7 + $0x270] sm:$0xff]
  %v1884 = vld [vmem:[%s7 + $0x278] sm:$0xff]
  %v1885 = vld [vmem:[%s7 + $0x280] sm:$0xff]
  %v1886 = vld [vmem:[%s7 + $0x288] sm:$0xff]
  %v1887 = vld [vmem:[%s7 + $0x290] sm:$0xff]
  %v1888 = vld [vmem:[%s7 + $0x298] sm:$0xff]
  %v1889 = vld [vmem:[%s7 + $0x2a0] sm:$0xff]
  %v1890 = vld [vmem:[%s7 + $0x2a8] sm:$0xff]
  %v1891 = vld [vmem:[%s7 + $0x2b0] sm:$0xff]
  %v1892 = vld [vmem:[%s7 + $0x2b8] sm:$0xff]
  %v1893 = vld [vmem:[%s7 + $0x2c0] sm:$0xff]
  %v1894 = vld [vmem:[%s7 + $0x2c8] sm:$0xff]
  %v1895 = vld [vmem:[%s7 + $0x2d0] sm:$0xff]
  %v1896 = vld [vmem:[%s7 + $0x2d8] sm:$0xff]
  %v1897 = vld [vmem:[%s7 + $0x2e0] sm:$0xff]
  %v1898 = vld [vmem:[%s7 + $0x2e8] sm:$0xff]
  %v1899 = vld [vmem:[%s7 + $0x2f0] sm:$0xff]
  %v1900 = vld [vmem:[%s7 + $0x2f8] sm:$0xff]
  %v1901 = vld [vmem:[%s7 + $0x300] sm:$0xff]
  %v1902 = vld [vmem:[%s7 + $0x308] sm:$0xff]
  %v1903 = vld [vmem:[%s7 + $0x310] sm:$0xff]
  %v1904 = vld [vmem:[%s7 + $0x318] sm:$0xff]
  %v1905 = vld [vmem:[%s7 + $0x320] sm:$0xff]
  %v1906 = vld [vmem:[%s7 + $0x328] sm:$0xff]
  %v1907 = vld [vmem:[%s7 + $0x330] sm:$0xff]
  %v1908 = vld [vmem:[%s7 + $0x338] sm:$0xff]
  %v1909 = vld [vmem:[%s7 + $0x340] sm:$0xff]
  %v1910 = vld [vmem:[%s7 + $0x348] sm:$0xff]
  %v1911 = vld [vmem:[%s7 + $0x350] sm:$0xff]
  %v1912 = vld [vmem:[%s7 + $0x358] sm:$0xff]
  %v1913 = vld [vmem:[%s7 + $0x360] sm:$0xff]
  %v1914 = vld [vmem:[%s7 + $0x368] sm:$0xff]
  %v1915 = vld [vmem:[%s7 + $0x370] sm:$0xff]
  %v1916 = vld [vmem:[%s7 + $0x378] sm:$0xff]
  %v1917 = vld [vmem:[%s7 + $0x380] sm:$0xff]
  %v1918 = vld [vmem:[%s7 + $0x388] sm:$0xff]
  %v1919 = vld [vmem:[%s7 + $0x390] sm:$0xff]
  %v1920 = vld [vmem:[%s7 + $0x398] sm:$0xff]
  %v1921 = vld [vmem:[%s7 + $0x3a0] sm:$0xff]
  %v1922 = vld [vmem:[%s7 + $0x3a8] sm:$0xff]
  %v1923 = vld [vmem:[%s7 + $0x3b0] sm:$0xff]
  %v1924 = vld [vmem:[%s7 + $0x3b8] sm:$0xff]
  %v1925 = vld [vmem:[%s7 + $0x3c0] sm:$0xff]
  %v1926 = vld [vmem:[%s7 + $0x3c8] sm:$0xff]
  %v1927 = vld [vmem:[%s7 + $0x3d0] sm:$0xff]
  %v1928 = vld [vmem:[%s7 + $0x3d8] sm:$0xff]
  %v1929 = vld [vmem:[%s7 + $0x3e0] sm:$0xff]
  %v1930 = vld [vmem:[%s7 + $0x3e8] sm:$0xff]
  %v1931 = vld [vmem:[%s7 + $0x3f0] sm:$0xff]
  %v1932 = vld [vmem:[%s7 + $0x3f8] sm:$0xff]
  %v1933 = vld [vmem:[%s8] sm:$0xf]
  %v1935 = vperm.slane %v1933, 0
  %v1936 = vperm.slane %v1933, 1
  %v1937 = vperm.slane %v1933, 2
  %v1938 = vperm.slane %v1933, 3
  %v2071 = vunpack.c.l.b16 %v1805
  %v2072 = vunpack.c.h.b16 %v1805
  %v2073 = vunpack.c.l.b16 %v1806
  %v2074 = vunpack.c.h.b16 %v1806
  %v2075 = vunpack.c.l.b16 %v1807
  %v2076 = vunpack.c.h.b16 %v1807
  %v2077 = vunpack.c.l.b16 %v1808
  %v2078 = vunpack.c.h.b16 %v1808
  %v2079 = vunpack.c.l.b16 %v1809
  %v2080 = vunpack.c.h.b16 %v1809
  %v2081 = vunpack.c.l.b16 %v1810
  %v2082 = vunpack.c.h.b16 %v1810
  %v2083 = vunpack.c.l.b16 %v1811
  %v2084 = vunpack.c.h.b16 %v1811
  %v2085 = vunpack.c.l.b16 %v1812
  %v2086 = vunpack.c.h.b16 %v1812
  %v2087 = vunpack.c.l.b16 %v1813
  %v2088 = vunpack.c.h.b16 %v1813
  %v2089 = vunpack.c.l.b16 %v1814
  %v2090 = vunpack.c.h.b16 %v1814
  %v2091 = vunpack.c.l.b16 %v1815
  %v2092 = vunpack.c.h.b16 %v1815
  %v2093 = vunpack.c.l.b16 %v1816
  %v2094 = vunpack.c.h.b16 %v1816
  %v2095 = vunpack.c.l.b16 %v1817
  %v2096 = vunpack.c.h.b16 %v1817
  %v2097 = vunpack.c.l.b16 %v1818
  %v2098 = vunpack.c.h.b16 %v1818
  %v2099 = vunpack.c.l.b16 %v1819
  %v2100 = vunpack.c.h.b16 %v1819
  %v2101 = vunpack.c.l.b16 %v1820
  %v2102 = vunpack.c.h.b16 %v1820
  %v2103 = vunpack.c.l.b16 %v1821
  %v2104 = vunpack.c.h.b16 %v1821
  %v2105 = vunpack.c.l.b16 %v1822
  %v2106 = vunpack.c.h.b16 %v1822
  %v2107 = vunpack.c.l.b16 %v1823
  %v2108 = vunpack.c.h.b16 %v1823
  %v2109 = vunpack.c.l.b16 %v1824
  %v2110 = vunpack.c.h.b16 %v1824
  %v2111 = vunpack.c.l.b16 %v1825
  %v2112 = vunpack.c.h.b16 %v1825
  %v2113 = vunpack.c.l.b16 %v1826
  %v2114 = vunpack.c.h.b16 %v1826
  %v2115 = vunpack.c.l.b16 %v1827
  %v2116 = vunpack.c.h.b16 %v1827
  %v2117 = vunpack.c.l.b16 %v1828
  %v2118 = vunpack.c.h.b16 %v1828
  %v2119 = vunpack.c.l.b16 %v1829
  %v2120 = vunpack.c.h.b16 %v1829
  %v2121 = vunpack.c.l.b16 %v1830
  %v2122 = vunpack.c.h.b16 %v1830
  %v2123 = vunpack.c.l.b16 %v1831
  %v2124 = vunpack.c.h.b16 %v1831
  %v2125 = vunpack.c.l.b16 %v1832
  %v2126 = vunpack.c.h.b16 %v1832
  %v2127 = vunpack.c.l.b16 %v1833
  %v2128 = vunpack.c.h.b16 %v1833
  %v2129 = vunpack.c.l.b16 %v1834
  %v2130 = vunpack.c.h.b16 %v1834
  %v2131 = vunpack.c.l.b16 %v1835
  %v2132 = vunpack.c.h.b16 %v1835
  %v2133 = vunpack.c.l.b16 %v1836
  %v2134 = vunpack.c.h.b16 %v1836
  %v2135 = vunpack.c.l.b16 %v1837
  %v2136 = vunpack.c.h.b16 %v1837
  %v2137 = vunpack.c.l.b16 %v1838
  %v2138 = vunpack.c.h.b16 %v1838
  %v2139 = vunpack.c.l.b16 %v1839
  %v2140 = vunpack.c.h.b16 %v1839
  %v2141 = vunpack.c.l.b16 %v1840
  %v2142 = vunpack.c.h.b16 %v1840
  %v2143 = vunpack.c.l.b16 %v1841
  %v2144 = vunpack.c.h.b16 %v1841
  %v2145 = vunpack.c.l.b16 %v1842
  %v2146 = vunpack.c.h.b16 %v1842
  %v2147 = vunpack.c.l.b16 %v1843
  %v2148 = vunpack.c.h.b16 %v1843
  %v2149 = vunpack.c.l.b16 %v1844
  %v2150 = vunpack.c.h.b16 %v1844
  %v2151 = vunpack.c.l.b16 %v1845
  %v2152 = vunpack.c.h.b16 %v1845
  %v2153 = vunpack.c.l.b16 %v1846
  %v2154 = vunpack.c.h.b16 %v1846
  %v2155 = vunpack.c.l.b16 %v1847
  %v2156 = vunpack.c.h.b16 %v1847
  %v2157 = vunpack.c.l.b16 %v1848
  %v2158 = vunpack.c.h.b16 %v1848
  %v2159 = vunpack.c.l.b16 %v1849
  %v2160 = vunpack.c.h.b16 %v1849
  %v2161 = vunpack.c.l.b16 %v1850
  %v2162 = vunpack.c.h.b16 %v1850
  %v2163 = vunpack.c.l.b16 %v1851
  %v2164 = vunpack.c.h.b16 %v1851
  %v2165 = vunpack.c.l.b16 %v1852
  %v2166 = vunpack.c.h.b16 %v1852
  %v2167 = vunpack.c.l.b16 %v1853
  %v2168 = vunpack.c.h.b16 %v1853
  %v2169 = vunpack.c.l.b16 %v1854
  %v2170 = vunpack.c.h.b16 %v1854
  %v2171 = vunpack.c.l.b16 %v1855
  %v2172 = vunpack.c.h.b16 %v1855
  %v2173 = vunpack.c.l.b16 %v1856
  %v2174 = vunpack.c.h.b16 %v1856
  %v2175 = vunpack.c.l.b16 %v1857
  %v2176 = vunpack.c.h.b16 %v1857
  %v2177 = vunpack.c.l.b16 %v1858
  %v2178 = vunpack.c.h.b16 %v1858
  %v2179 = vunpack.c.l.b16 %v1859
  %v2180 = vunpack.c.h.b16 %v1859
  %v2181 = vunpack.c.l.b16 %v1860
  %v2182 = vunpack.c.h.b16 %v1860
  %v2183 = vunpack.c.l.b16 %v1861
  %v2184 = vunpack.c.h.b16 %v1861
  %v2185 = vunpack.c.l.b16 %v1862
  %v2186 = vunpack.c.h.b16 %v1862
  %v2187 = vunpack.c.l.b16 %v1863
  %v2188 = vunpack.c.h.b16 %v1863
  %v2189 = vunpack.c.l.b16 %v1864
  %v2190 = vunpack.c.h.b16 %v1864
  %v2191 = vunpack.c.l.b16 %v1865
  %v2192 = vunpack.c.h.b16 %v1865
  %v2193 = vunpack.c.l.b16 %v1866
  %v2194 = vunpack.c.h.b16 %v1866
  %v2195 = vunpack.c.l.b16 %v1867
  %v2196 = vunpack.c.h.b16 %v1867
  %v2197 = vunpack.c.l.b16 %v1868
  %v2198 = vunpack.c.h.b16 %v1868
  %v2199 = vunpack.c.l.b16 %v1869
  %v2200 = vunpack.c.h.b16 %v1869
  %v2201 = vunpack.c.l.b16 %v1870
  %v2202 = vunpack.c.h.b16 %v1870
  %v2203 = vunpack.c.l.b16 %v1871
  %v2204 = vunpack.c.h.b16 %v1871
  %v2205 = vunpack.c.l.b16 %v1872
  %v2206 = vunpack.c.h.b16 %v1872
  %v2207 = vunpack.c.l.b16 %v1873
  %v2208 = vunpack.c.h.b16 %v1873
  %v2209 = vunpack.c.l.b16 %v1874
  %v2210 = vunpack.c.h.b16 %v1874
  %v2211 = vunpack.c.l.b16 %v1875
  %v2212 = vunpack.c.h.b16 %v1875
  %v2213 = vunpack.c.l.b16 %v1876
  %v2214 = vunpack.c.h.b16 %v1876
  %v2215 = vunpack.c.l.b16 %v1877
  %v2216 = vunpack.c.h.b16 %v1877
  %v2217 = vunpack.c.l.b16 %v1878
  %v2218 = vunpack.c.h.b16 %v1878
  %v2219 = vunpack.c.l.b16 %v1879
  %v2220 = vunpack.c.h.b16 %v1879
  %v2221 = vunpack.c.l.b16 %v1880
  %v2222 = vunpack.c.h.b16 %v1880
  %v2223 = vunpack.c.l.b16 %v1881
  %v2224 = vunpack.c.h.b16 %v1881
  %v2225 = vunpack.c.l.b16 %v1882
  %v2226 = vunpack.c.h.b16 %v1882
  %v2227 = vunpack.c.l.b16 %v1883
  %v2228 = vunpack.c.h.b16 %v1883
  %v2229 = vunpack.c.l.b16 %v1884
  %v2230 = vunpack.c.h.b16 %v1884
  %v2231 = vunpack.c.l.b16 %v1885
  %v2232 = vunpack.c.h.b16 %v1885
  %v2233 = vunpack.c.l.b16 %v1886
  %v2234 = vunpack.c.h.b16 %v1886
  %v2235 = vunpack.c.l.b16 %v1887
  %v2236 = vunpack.c.h.b16 %v1887
  %v2237 = vunpack.c.l.b16 %v1888
  %v2238 = vunpack.c.h.b16 %v1888
  %v2239 = vunpack.c.l.b16 %v1889
  %v2240 = vunpack.c.h.b16 %v1889
  %v2241 = vunpack.c.l.b16 %v1890
  %v2242 = vunpack.c.h.b16 %v1890
  %v2243 = vunpack.c.l.b16 %v1891
  %v2244 = vunpack.c.h.b16 %v1891
  %v2245 = vunpack.c.l.b16 %v1892
  %v2246 = vunpack.c.h.b16 %v1892
  %v2247 = vunpack.c.l.b16 %v1893
  %v2248 = vunpack.c.h.b16 %v1893
  %v2249 = vunpack.c.l.b16 %v1894
  %v2250 = vunpack.c.h.b16 %v1894
  %v2251 = vunpack.c.l.b16 %v1895
  %v2252 = vunpack.c.h.b16 %v1895
  %v2253 = vunpack.c.l.b16 %v1896
  %v2254 = vunpack.c.h.b16 %v1896
  %v2255 = vunpack.c.l.b16 %v1897
  %v2256 = vunpack.c.h.b16 %v1897
  %v2257 = vunpack.c.l.b16 %v1898
  %v2258 = vunpack.c.h.b16 %v1898
  %v2259 = vunpack.c.l.b16 %v1899
  %v2260 = vunpack.c.h.b16 %v1899
  %v2261 = vunpack.c.l.b16 %v1900
  %v2262 = vunpack.c.h.b16 %v1900
  %v2263 = vunpack.c.l.b16 %v1901
  %v2264 = vunpack.c.h.b16 %v1901
  %v2265 = vunpack.c.l.b16 %v1902
  %v2266 = vunpack.c.h.b16 %v1902
  %v2267 = vunpack.c.l.b16 %v1903
  %v2268 = vunpack.c.h.b16 %v1903
  %v2269 = vunpack.c.l.b16 %v1904
  %v2270 = vunpack.c.h.b16 %v1904
  %v2271 = vunpack.c.l.b16 %v1905
  %v2272 = vunpack.c.h.b16 %v1905
  %v2273 = vunpack.c.l.b16 %v1906
  %v2274 = vunpack.c.h.b16 %v1906
  %v2275 = vunpack.c.l.b16 %v1907
  %v2276 = vunpack.c.h.b16 %v1907
  %v2277 = vunpack.c.l.b16 %v1908
  %v2278 = vunpack.c.h.b16 %v1908
  %v2279 = vunpack.c.l.b16 %v1909
  %v2280 = vunpack.c.h.b16 %v1909
  %v2281 = vunpack.c.l.b16 %v1910
  %v2282 = vunpack.c.h.b16 %v1910
  %v2283 = vunpack.c.l.b16 %v1911
  %v2284 = vunpack.c.h.b16 %v1911
  %v2285 = vunpack.c.l.b16 %v1912
  %v2286 = vunpack.c.h.b16 %v1912
  %v2287 = vunpack.c.l.b16 %v1913
  %v2288 = vunpack.c.h.b16 %v1913
  %v2289 = vunpack.c.l.b16 %v1914
  %v2290 = vunpack.c.h.b16 %v1914
  %v2291 = vunpack.c.l.b16 %v1915
  %v2292 = vunpack.c.h.b16 %v1915
  %v2293 = vunpack.c.l.b16 %v1916
  %v2294 = vunpack.c.h.b16 %v1916
  %v2295 = vunpack.c.l.b16 %v1917
  %v2296 = vunpack.c.h.b16 %v1917
  %v2297 = vunpack.c.l.b16 %v1918
  %v2298 = vunpack.c.h.b16 %v1918
  %v2299 = vunpack.c.l.b16 %v1919
  %v2300 = vunpack.c.h.b16 %v1919
  %v2301 = vunpack.c.l.b16 %v1920
  %v2302 = vunpack.c.h.b16 %v1920
  %v2303 = vunpack.c.l.b16 %v1921
  %v2304 = vunpack.c.h.b16 %v1921
  %v2305 = vunpack.c.l.b16 %v1922
  %v2306 = vunpack.c.h.b16 %v1922
  %v2307 = vunpack.c.l.b16 %v1923
  %v2308 = vunpack.c.h.b16 %v1923
  %v2309 = vunpack.c.l.b16 %v1924
  %v2310 = vunpack.c.h.b16 %v1924
  %v2311 = vunpack.c.l.b16 %v1925
  %v2312 = vunpack.c.h.b16 %v1925
  %v2313 = vunpack.c.l.b16 %v1926
  %v2314 = vunpack.c.h.b16 %v1926
  %v2315 = vunpack.c.l.b16 %v1927
  %v2316 = vunpack.c.h.b16 %v1927
  %v2317 = vunpack.c.l.b16 %v1928
  %v2318 = vunpack.c.h.b16 %v1928
  %v2319 = vunpack.c.l.b16 %v1929
  %v2320 = vunpack.c.h.b16 %v1929
  %v2321 = vunpack.c.l.b16 %v1930
  %v2322 = vunpack.c.h.b16 %v1930
  %v2323 = vunpack.c.l.b16 %v1931
  %v2324 = vunpack.c.h.b16 %v1931
  %v2325 = vunpack.c.l.b16 %v1932
  %v2326 = vunpack.c.h.b16 %v1932
  %v2327 = vpack.c.b16 %v2075, %v2071
  %v2328 = vpack.c.b16 %v2076, %v2072
  %v2329 = vpack.c.b16 %v2077, %v2073
  %v2330 = vpack.c.b16 %v2078, %v2074
  %v2331 = vpack.c.b16 %v2083, %v2079
  %v2332 = vpack.c.b16 %v2084, %v2080
  %v2333 = vpack.c.b16 %v2085, %v2081
  %v2334 = vpack.c.b16 %v2086, %v2082
  %v2335 = vpack.c.b16 %v2091, %v2087
  %v2336 = vpack.c.b16 %v2092, %v2088
  %v2337 = vpack.c.b16 %v2093, %v2089
  %v2338 = vpack.c.b16 %v2094, %v2090
  %v2339 = vpack.c.b16 %v2099, %v2095
  %v2340 = vpack.c.b16 %v2100, %v2096
  %v2341 = vpack.c.b16 %v2101, %v2097
  %v2342 = vpack.c.b16 %v2102, %v2098
  %v2343 = vpack.c.b16 %v2107, %v2103
  %v2344 = vpack.c.b16 %v2108, %v2104
  %v2345 = vpack.c.b16 %v2109, %v2105
  %v2346 = vpack.c.b16 %v2110, %v2106
  %v2347 = vpack.c.b16 %v2115, %v2111
  %v2348 = vpack.c.b16 %v2116, %v2112
  %v2349 = vpack.c.b16 %v2117, %v2113
  %v2350 = vpack.c.b16 %v2118, %v2114
  %v2351 = vpack.c.b16 %v2123, %v2119
  %v2352 = vpack.c.b16 %v2124, %v2120
  %v2353 = vpack.c.b16 %v2125, %v2121
  %v2354 = vpack.c.b16 %v2126, %v2122
  %v2355 = vpack.c.b16 %v2131, %v2127
  %v2356 = vpack.c.b16 %v2132, %v2128
  %v2357 = vpack.c.b16 %v2133, %v2129
  %v2358 = vpack.c.b16 %v2134, %v2130
  %v2359 = vpack.c.b16 %v2139, %v2135
  %v2360 = vpack.c.b16 %v2140, %v2136
  %v2361 = vpack.c.b16 %v2141, %v2137
  %v2362 = vpack.c.b16 %v2142, %v2138
  %v2363 = vpack.c.b16 %v2147, %v2143
  %v2364 = vpack.c.b16 %v2148, %v2144
  %v2365 = vpack.c.b16 %v2149, %v2145
  %v2366 = vpack.c.b16 %v2150, %v2146
  %v2367 = vpack.c.b16 %v2155, %v2151
  %v2368 = vpack.c.b16 %v2156, %v2152
  %v2369 = vpack.c.b16 %v2157, %v2153
  %v2370 = vpack.c.b16 %v2158, %v2154
  %v2371 = vpack.c.b16 %v2163, %v2159
  %v2372 = vpack.c.b16 %v2164, %v2160
  %v2373 = vpack.c.b16 %v2165, %v2161
  %v2374 = vpack.c.b16 %v2166, %v2162
  %v2375 = vpack.c.b16 %v2171, %v2167
  %v2376 = vpack.c.b16 %v2172, %v2168
  %v2377 = vpack.c.b16 %v2173, %v2169
  %v2378 = vpack.c.b16 %v2174, %v2170
  %v2379 = vpack.c.b16 %v2179, %v2175
  %v2380 = vpack.c.b16 %v2180, %v2176
  %v2381 = vpack.c.b16 %v2181, %v2177
  %v2382 = vpack.c.b16 %v2182, %v2178
  %v2383 = vpack.c.b16 %v2187, %v2183
  %v2384 = vpack.c.b16 %v2188, %v2184
  %v2385 = vpack.c.b16 %v2189, %v2185
  %v2386 = vpack.c.b16 %v2190, %v2186
  %v2387 = vpack.c.b16 %v2195, %v2191
  %v2388 = vpack.c.b16 %v2196, %v2192
  %v2389 = vpack.c.b16 %v2197, %v2193
  %v2390 = vpack.c.b16 %v2198, %v2194
  %v2391 = vpack.c.b16 %v2203, %v2199
  %v2392 = vpack.c.b16 %v2204, %v2200
  %v2393 = vpack.c.b16 %v2205, %v2201
  %v2394 = vpack.c.b16 %v2206, %v2202
  %v2395 = vpack.c.b16 %v2211, %v2207
  %v2396 = vpack.c.b16 %v2212, %v2208
  %v2397 = vpack.c.b16 %v2213, %v2209
  %v2398 = vpack.c.b16 %v2214, %v2210
  %v2399 = vpack.c.b16 %v2219, %v2215
  %v2400 = vpack.c.b16 %v2220, %v2216
  %v2401 = vpack.c.b16 %v2221, %v2217
  %v2402 = vpack.c.b16 %v2222, %v2218
  %v2403 = vpack.c.b16 %v2227, %v2223
  %v2404 = vpack.c.b16 %v2228, %v2224
  %v2405 = vpack.c.b16 %v2229, %v2225
  %v2406 = vpack.c.b16 %v2230, %v2226
  %v2407 = vpack.c.b16 %v2235, %v2231
  %v2408 = vpack.c.b16 %v2236, %v2232
  %v2409 = vpack.c.b16 %v2237, %v2233
  %v2410 = vpack.c.b16 %v2238, %v2234
  %v2411 = vpack.c.b16 %v2243, %v2239
  %v2412 = vpack.c.b16 %v2244, %v2240
  %v2413 = vpack.c.b16 %v2245, %v2241
  %v2414 = vpack.c.b16 %v2246, %v2242
  %v2415 = vpack.c.b16 %v2251, %v2247
  %v2416 = vpack.c.b16 %v2252, %v2248
  %v2417 = vpack.c.b16 %v2253, %v2249
  %v2418 = vpack.c.b16 %v2254, %v2250
  %v2419 = vpack.c.b16 %v2259, %v2255
  %v2420 = vpack.c.b16 %v2260, %v2256
  %v2421 = vpack.c.b16 %v2261, %v2257
  %v2422 = vpack.c.b16 %v2262, %v2258
  %v2423 = vpack.c.b16 %v2267, %v2263
  %v2424 = vpack.c.b16 %v2268, %v2264
  %v2425 = vpack.c.b16 %v2269, %v2265
  %v2426 = vpack.c.b16 %v2270, %v2266
  %v2427 = vpack.c.b16 %v2275, %v2271
  %v2428 = vpack.c.b16 %v2276, %v2272
  %v2429 = vpack.c.b16 %v2277, %v2273
  %v2430 = vpack.c.b16 %v2278, %v2274
  %v2431 = vpack.c.b16 %v2283, %v2279
  %v2432 = vpack.c.b16 %v2284, %v2280
  %v2433 = vpack.c.b16 %v2285, %v2281
  %v2434 = vpack.c.b16 %v2286, %v2282
  %v2435 = vpack.c.b16 %v2291, %v2287
  %v2436 = vpack.c.b16 %v2292, %v2288
  %v2437 = vpack.c.b16 %v2293, %v2289
  %v2438 = vpack.c.b16 %v2294, %v2290
  %v2439 = vpack.c.b16 %v2299, %v2295
  %v2440 = vpack.c.b16 %v2300, %v2296
  %v2441 = vpack.c.b16 %v2301, %v2297
  %v2442 = vpack.c.b16 %v2302, %v2298
  %v2443 = vpack.c.b16 %v2307, %v2303
  %v2444 = vpack.c.b16 %v2308, %v2304
  %v2445 = vpack.c.b16 %v2309, %v2305
  %v2446 = vpack.c.b16 %v2310, %v2306
  %v2447 = vpack.c.b16 %v2315, %v2311
  %v2448 = vpack.c.b16 %v2316, %v2312
  %v2449 = vpack.c.b16 %v2317, %v2313
  %v2450 = vpack.c.b16 %v2318, %v2314
  %v2451 = vpack.c.b16 %v2323, %v2319
  %v2452 = vpack.c.b16 %v2324, %v2320
  %v2453 = vpack.c.b16 %v2325, %v2321
  %v2454 = vpack.c.b16 %v2326, %v2322
  %2583 = vmatpush.bf16.msra.mxu0 %v2355
  %2584 = vmatpush.bf16.msra.mxu0 %v2351
  %2585 = vmatpush.bf16.msra.mxu0 %v2347
  %2586 = vmatpush.bf16.msra.mxu0 %v2343
  %2587 = vmatpush.bf16.msra.mxu0 %v2339
  %2588 = vmatpush.bf16.msra.mxu0 %v2335
  %2589 = vmatpush.bf16.msra.mxu0 %v2331
  %2590 = vmatpush.bf16.msra.mxu0 %v2327
  %2591 = vmatmul.bf16.gmra.mxu0 %v1801
  %v2592 = vpop.f32.mrf.mxu0
  %v2593 = vadd.f32 %v1935, %v2592
  %v2594 = vpop.f32.mrf.mxu0
  %2595 = vdwg.mxu0
  %2596 = vmatpush.bf16.msra.mxu0 %v2387
  %2597 = vmatpush.bf16.msra.mxu0 %v2383
  %2598 = vmatpush.bf16.msra.mxu0 %v2379
  %2599 = vmatpush.bf16.msra.mxu0 %v2375
  %2600 = vmatpush.bf16.msra.mxu0 %v2371
  %2601 = vmatpush.bf16.msra.mxu0 %v2367
  %2602 = vmatpush.bf16.msra.mxu0 %v2363
  %2603 = vmatpush.bf16.msra.mxu0 %v2359
  %2604 = vmatmul.bf16.gmra.mxu0 %v1802
  %v2605 = vpop.f32.mrf.mxu0
  %v2606 = vadd.f32 %v2593, %v2605
  %v2607 = vpop.f32.mrf.mxu0
  %2608 = vdwg.mxu0
  %2609 = vmatpush.bf16.msra.mxu0 %v2419
  %2610 = vmatpush.bf16.msra.mxu0 %v2415
  %2611 = vmatpush.bf16.msra.mxu0 %v2411
  %2612 = vmatpush.bf16.msra.mxu0 %v2407
  %2613 = vmatpush.bf16.msra.mxu0 %v2403
  %2614 = vmatpush.bf16.msra.mxu0 %v2399
  %2615 = vmatpush.bf16.msra.mxu0 %v2395
  %2616 = vmatpush.bf16.msra.mxu0 %v2391
  %2617 = vmatmul.bf16.gmra.mxu0 %v1803
  %v2618 = vpop.f32.mrf.mxu0
  %v2619 = vadd.f32 %v2606, %v2618
  %v2620 = vpop.f32.mrf.mxu0
  %2621 = vdwg.mxu0
  %2622 = vmatpush.bf16.msra.mxu0 %v2451
  %2623 = vmatpush.bf16.msra.mxu0 %v2447
  %2624 = vmatpush.bf16.msra.mxu0 %v2443
  %2625 = vmatpush.bf16.msra.mxu0 %v2439
  %2626 = vmatpush.bf16.msra.mxu0 %v2435
  %2627 = vmatpush.bf16.msra.mxu0 %v2431
  %2628 = vmatpush.bf16.msra.mxu0 %v2427
  %2629 = vmatpush.bf16.msra.mxu0 %v2423
  %2630 = vmatmul.bf16.gmra.mxu0 %v1804
  %v2631 = vpop.f32.mrf.mxu0
  %v2632 = vadd.f32 %v2619, %v2631
  %v2633 = vpop.f32.mrf.mxu0
  %2634 = vdwg.mxu0
  %2635 = vmatpush.bf16.msra.mxu0 %v2356
  %2636 = vmatpush.bf16.msra.mxu0 %v2352
  %2637 = vmatpush.bf16.msra.mxu0 %v2348
  %2638 = vmatpush.bf16.msra.mxu0 %v2344
  %2639 = vmatpush.bf16.msra.mxu0 %v2340
  %2640 = vmatpush.bf16.msra.mxu0 %v2336
  %2641 = vmatpush.bf16.msra.mxu0 %v2332
  %2642 = vmatpush.bf16.msra.mxu0 %v2328
  %2643 = vmatmul.bf16.gmra.mxu0 %v1801
  %v2644 = vpop.f32.mrf.mxu0
  %v2645 = vadd.f32 %v1936, %v2644
  %v2646 = vpop.f32.mrf.mxu0
  %2647 = vdwg.mxu0
  %2648 = vmatpush.bf16.msra.mxu0 %v2388
  %2649 = vmatpush.bf16.msra.mxu0 %v2384
  %2650 = vmatpush.bf16.msra.mxu0 %v2380
  %2651 = vmatpush.bf16.msra.mxu0 %v2376
  %2652 = vmatpush.bf16.msra.mxu0 %v2372
  %2653 = vmatpush.bf16.msra.mxu0 %v2368
  %2654 = vmatpush.bf16.msra.mxu0 %v2364
  %2655 = vmatpush.bf16.msra.mxu0 %v2360
  %2656 = vmatmul.bf16.gmra.mxu0 %v1802
  %v2657 = vpop.f32.mrf.mxu0
  %v2658 = vadd.f32 %v2645, %v2657
  %v2659 = vpop.f32.mrf.mxu0
  %2660 = vdwg.mxu0
  %2661 = vmatpush.bf16.msra.mxu0 %v2420
  %2662 = vmatpush.bf16.msra.mxu0 %v2416
  %2663 = vmatpush.bf16.msra.mxu0 %v2412
  %2664 = vmatpush.bf16.msra.mxu0 %v2408
  %2665 = vmatpush.bf16.msra.mxu0 %v2404
  %2666 = vmatpush.bf16.msra.mxu0 %v2400
  %2667 = vmatpush.bf16.msra.mxu0 %v2396
  %2668 = vmatpush.bf16.msra.mxu0 %v2392
  %2669 = vmatmul.bf16.gmra.mxu0 %v1803
  %v2670 = vpop.f32.mrf.mxu0
  %v2671 = vadd.f32 %v2658, %v2670
  %v2672 = vpop.f32.mrf.mxu0
  %2673 = vdwg.mxu0
  %2674 = vmatpush.bf16.msra.mxu0 %v2452
  %2675 = vmatpush.bf16.msra.mxu0 %v2448
  %2676 = vmatpush.bf16.msra.mxu0 %v2444
  %2677 = vmatpush.bf16.msra.mxu0 %v2440
  %2678 = vmatpush.bf16.msra.mxu0 %v2436
  %2679 = vmatpush.bf16.msra.mxu0 %v2432
  %2680 = vmatpush.bf16.msra.mxu0 %v2428
  %2681 = vmatpush.bf16.msra.mxu0 %v2424
  %2682 = vmatmul.bf16.gmra.mxu0 %v1804
  %v2683 = vpop.f32.mrf.mxu0
  %v2684 = vadd.f32 %v2671, %v2683
  %v2685 = vpop.f32.mrf.mxu0
  %2686 = vdwg.mxu0
  %2687 = vmatpush.bf16.msra.mxu0 %v2357
  %2688 = vmatpush.bf16.msra.mxu0 %v2353
  %2689 = vmatpush.bf16.msra.mxu0 %v2349
  %2690 = vmatpush.bf16.msra.mxu0 %v2345
  %2691 = vmatpush.bf16.msra.mxu0 %v2341
  %2692 = vmatpush.bf16.msra.mxu0 %v2337
  %2693 = vmatpush.bf16.msra.mxu0 %v2333
  %2694 = vmatpush.bf16.msra.mxu0 %v2329
  %2695 = vmatmul.bf16.gmra.mxu0 %v1801
  %v2696 = vpop.f32.mrf.mxu0
  %v2697 = vadd.f32 %v1937, %v2696
  %v2698 = vpop.f32.mrf.mxu0
  %2699 = vdwg.mxu0
  %2700 = vmatpush.bf16.msra.mxu0 %v2389
  %2701 = vmatpush.bf16.msra.mxu0 %v2385
  %2702 = vmatpush.bf16.msra.mxu0 %v2381
  %2703 = vmatpush.bf16.msra.mxu0 %v2377
  %2704 = vmatpush.bf16.msra.mxu0 %v2373
  %2705 = vmatpush.bf16.msra.mxu0 %v2369
  %2706 = vmatpush.bf16.msra.mxu0 %v2365
  %2707 = vmatpush.bf16.msra.mxu0 %v2361
  %2708 = vmatmul.bf16.gmra.mxu0 %v1802
  %v2709 = vpop.f32.mrf.mxu0
  %v2710 = vadd.f32 %v2697, %v2709
  %v2711 = vpop.f32.mrf.mxu0
  %2712 = vdwg.mxu0
  %2713 = vmatpush.bf16.msra.mxu0 %v2421
  %2714 = vmatpush.bf16.msra.mxu0 %v2417
  %2715 = vmatpush.bf16.msra.mxu0 %v2413
  %2716 = vmatpush.bf16.msra.mxu0 %v2409
  %2717 = vmatpush.bf16.msra.mxu0 %v2405
  %2718 = vmatpush.bf16.msra.mxu0 %v2401
  %2719 = vmatpush.bf16.msra.mxu0 %v2397
  %2720 = vmatpush.bf16.msra.mxu0 %v2393
  %2721 = vmatmul.bf16.gmra.mxu0 %v1803
  %v2722 = vpop.f32.mrf.mxu0
  %v2723 = vadd.f32 %v2710, %v2722
  %v2724 = vpop.f32.mrf.mxu0
  %2725 = vdwg.mxu0
  %2726 = vmatpush.bf16.msra.mxu0 %v2453
  %2727 = vmatpush.bf16.msra.mxu0 %v2449
  %2728 = vmatpush.bf16.msra.mxu0 %v2445
  %2729 = vmatpush.bf16.msra.mxu0 %v2441
  %2730 = vmatpush.bf16.msra.mxu0 %v2437
  %2731 = vmatpush.bf16.msra.mxu0 %v2433
  %2732 = vmatpush.bf16.msra.mxu0 %v2429
  %2733 = vmatpush.bf16.msra.mxu0 %v2425
  %2734 = vmatmul.bf16.gmra.mxu0 %v1804
  %v2735 = vpop.f32.mrf.mxu0
  %v2736 = vadd.f32 %v2723, %v2735
  %v2737 = vpop.f32.mrf.mxu0
  %2738 = vdwg.mxu0
  %2739 = vmatpush.bf16.msra.mxu0 %v2358
  %2740 = vmatpush.bf16.msra.mxu0 %v2354
  %2741 = vmatpush.bf16.msra.mxu0 %v2350
  %2742 = vmatpush.bf16.msra.mxu0 %v2346
  %2743 = vmatpush.bf16.msra.mxu0 %v2342
  %2744 = vmatpush.bf16.msra.mxu0 %v2338
  %2745 = vmatpush.bf16.msra.mxu0 %v2334
  %2746 = vmatpush.bf16.msra.mxu0 %v2330
  %2747 = vmatmul.bf16.gmra.mxu0 %v1801
  %v2748 = vpop.f32.mrf.mxu0
  %v2749 = vadd.f32 %v1938, %v2748
  %v2750 = vpop.f32.mrf.mxu0
  %2751 = vdwg.mxu0
  %2752 = vmatpush.bf16.msra.mxu0 %v2390
  %2753 = vmatpush.bf16.msra.mxu0 %v2386
  %2754 = vmatpush.bf16.msra.mxu0 %v2382
  %2755 = vmatpush.bf16.msra.mxu0 %v2378
  %2756 = vmatpush.bf16.msra.mxu0 %v2374
  %2757 = vmatpush.bf16.msra.mxu0 %v2370
  %2758 = vmatpush.bf16.msra.mxu0 %v2366
  %2759 = vmatpush.bf16.msra.mxu0 %v2362
  %2760 = vmatmul.bf16.gmra.mxu0 %v1802
  %v2761 = vpop.f32.mrf.mxu0
  %v2762 = vadd.f32 %v2749, %v2761
  %v2763 = vpop.f32.mrf.mxu0
  %2764 = vdwg.mxu0
  %2765 = vmatpush.bf16.msra.mxu0 %v2422
  %2766 = vmatpush.bf16.msra.mxu0 %v2418
  %2767 = vmatpush.bf16.msra.mxu0 %v2414
  %2768 = vmatpush.bf16.msra.mxu0 %v2410
  %2769 = vmatpush.bf16.msra.mxu0 %v2406
  %2770 = vmatpush.bf16.msra.mxu0 %v2402
  %2771 = vmatpush.bf16.msra.mxu0 %v2398
  %2772 = vmatpush.bf16.msra.mxu0 %v2394
  %2773 = vmatmul.bf16.gmra.mxu0 %v1803
  %v2774 = vpop.f32.mrf.mxu0
  %v2775 = vadd.f32 %v2762, %v2774
  %v2776 = vpop.f32.mrf.mxu0
  %2777 = vdwg.mxu0
  %2778 = vmatpush.bf16.msra.mxu0 %v2454
  %2779 = vmatpush.bf16.msra.mxu0 %v2450
  %2780 = vmatpush.bf16.msra.mxu0 %v2446
  %2781 = vmatpush.bf16.msra.mxu0 %v2442
  %2782 = vmatpush.bf16.msra.mxu0 %v2438
  %2783 = vmatpush.bf16.msra.mxu0 %v2434
  %2784 = vmatpush.bf16.msra.mxu0 %v2430
  %2785 = vmatpush.bf16.msra.mxu0 %v2426
  %2786 = vmatmul.bf16.gmra.mxu0 %v1804
  %v2787 = vpop.f32.mrf.mxu0
  %v2788 = vadd.f32 %v2775, %v2787
  %v2789 = vpop.f32.mrf.mxu0
  %2790 = vdwg.mxu0
  %v2791 = vmul.f32 %v2632, 0.2
  %v2792 = vmul.f32 %v2684, 0.2
  %v2793 = vmul.f32 %v2736, 0.2
  %v2794 = vmul.f32 %v2788, 0.2
  %v2795 = vmax.f32 %v2632, %v2791
  %v2796 = vmax.f32 %v2684, %v2792
  %v2797 = vmax.f32 %v2736, %v2793
  %v2798 = vmax.f32 %v2788, %v2794
  %v2799 = vld [vmem:[%s9] sm:$0xff]
  %v2800 = vld [vmem:[%s9 + $0x8] sm:$0xff]
  %v2801 = vpack.c.bf16 %v2795, %v2795
  %v2802 = vpack.c.bf16 %v2796, %v2796
  %v2803 = vpack.c.bf16 %v2797, %v2797
  %v2804 = vpack.c.bf16 %v2798, %v2798
  %s2805 = sld [smem:[#allocation2]]
  %v2806 = vstv %s2805
  %v2809 = vunpack.c.l.b16 %v2799
  %v2810 = vunpack.c.h.b16 %v2799
  %v2811 = vunpack.c.l.b16 %v2800
  %v2812 = vunpack.c.h.b16 %v2800
  %v2813 = vpack.c.b16 %v2809, %v2809
  %v2814 = vpack.c.b16 %v2810, %v2810
  %v2815 = vpack.c.b16 %v2811, %v2811
  %v2816 = vpack.c.b16 %v2812, %v2812
  %2821 = vmatpush.bf16.xpose.msra.mxu0 0
  %2822 = vmatpush.bf16.xpose.msra.mxu0 0
  %2823 = vmatpush.bf16.xpose.msra.mxu0 0
  %2824 = vmatpush.bf16.xpose.msra.mxu0 0
  %2825 = vmatpush.bf16.xpose.msra.mxu0 0
  %2826 = vmatpush.bf16.xpose.msra.mxu0 0
  %2827 = vmatpush.bf16.xpose.msra.mxu0 0
  %2828 = vmatpush.bf16.xpose.msra.mxu0 %v2801
  %2829 = vmatmul.bf16.gmra.mxu0 %v2813
  %v2830 = vpop.f32.mrf.mxu0
  %v2831 = vadd.f32 %v2806, %v2830
  %v2832 = vpop.f32.mrf.mxu0
  %2833 = vdwg.mxu0
  %2834 = vmatpush.bf16.xpose.msra.mxu0 0
  %2835 = vmatpush.bf16.xpose.msra.mxu0 0
  %2836 = vmatpush.bf16.xpose.msra.mxu0 0
  %2837 = vmatpush.bf16.xpose.msra.mxu0 0
  %2838 = vmatpush.bf16.xpose.msra.mxu0 0
  %2839 = vmatpush.bf16.xpose.msra.mxu0 0
  %2840 = vmatpush.bf16.xpose.msra.mxu0 0
  %2841 = vmatpush.bf16.xpose.msra.mxu0 %v2802
  %2842 = vmatmul.bf16.gmra.mxu0 %v2814
  %v2843 = vpop.f32.mrf.mxu0
  %v2844 = vadd.f32 %v2831, %v2843
  %v2845 = vpop.f32.mrf.mxu0
  %2846 = vdwg.mxu0
  %2847 = vmatpush.bf16.xpose.msra.mxu0 0
  %2848 = vmatpush.bf16.xpose.msra.mxu0 0
  %2849 = vmatpush.bf16.xpose.msra.mxu0 0
  %2850 = vmatpush.bf16.xpose.msra.mxu0 0
  %2851 = vmatpush.bf16.xpose.msra.mxu0 0
  %2852 = vmatpush.bf16.xpose.msra.mxu0 0
  %2853 = vmatpush.bf16.xpose.msra.mxu0 0
  %2854 = vmatpush.bf16.xpose.msra.mxu0 %v2803
  %2855 = vmatmul.bf16.gmra.mxu0 %v2815
  %v2856 = vpop.f32.mrf.mxu0
  %v2857 = vadd.f32 %v2844, %v2856
  %v2858 = vpop.f32.mrf.mxu0
  %2859 = vdwg.mxu0
  %2860 = vmatpush.bf16.xpose.msra.mxu0 0
  %2861 = vmatpush.bf16.xpose.msra.mxu0 0
  %2862 = vmatpush.bf16.xpose.msra.mxu0 0
  %2863 = vmatpush.bf16.xpose.msra.mxu0 0
  %2864 = vmatpush.bf16.xpose.msra.mxu0 0
  %2865 = vmatpush.bf16.xpose.msra.mxu0 0
  %2866 = vmatpush.bf16.xpose.msra.mxu0 0
  %2867 = vmatpush.bf16.xpose.msra.mxu0 %v2804
  %2868 = vmatmul.bf16.gmra.mxu0 %v2816
  %v2869 = vpop.f32.mrf.mxu0
  %v2870 = vadd.f32 %v2857, %v2869
  %v2871 = vpop.f32.mrf.mxu0
  %2872 = vdwg.mxu0
  %vm2873 = vcmask 64512
  %2874 = vst.msk [vmem:[%s11] sm:$0xff] %vm2873, %v2870
  // Predicated region
  $region46: #{discriminator_forward.1} parent=0 // pred_check
    _
  $region47: #{discriminator_forward.1} parent=0 // pred_check_branch
    %2876 = sbr.rel (0) target = $region49
  $region48: #{discriminator_forward.1} parent=0 // pred_region
    _
  $region49: #{discriminator_forward.1} parent=0 // pred_fallthru
    _
  // Predicated region
  $region50: #{discriminator_forward.1} parent=0 // pred_check
    _
  $region51: #{discriminator_forward.1} parent=0 // pred_check_branch
    %2878 = sbr.rel (0) target = $region53
  $region52: #{discriminator_forward.1} parent=0 // pred_region
    _
  $region53: #{discriminator_forward.1} parent=0 // pred_fallthru
    _

</llo_original>
